<compile_context>
chip_gen: v7x
topology: tpu7x:2x2x1
jax: 0.10.0
libtpu: 0.0.40
codegen_flags: <defaults>
</compile_context>

<pallas_src>
import functools

import jax
import jax.numpy as jnp
from jax.experimental import pallas as pl
from jax.experimental.pallas import tpu as pltpu

_INV_SQRT2 = 0.7071067811865476


def _erf(x):
    """erf via Abramowitz & Stegun 7.1.26 (|err| < 1.5e-7).

    Uses only ops with guaranteed Mosaic lowerings (exp, mul/add, div, select)
    so the kernel does not depend on an erf lowering rule being available.
    """
    a1, a2, a3, a4, a5 = (0.254829592, -0.284496736, 1.421413741,
                          -1.453152027, 1.061405429)
    p = 0.3275911
    s = jnp.where(x < 0.0, -1.0, 1.0)
    z = jnp.abs(x)
    t = 1.0 / (1.0 + p * z)
    poly = ((((a5 * t + a4) * t + a3) * t + a2) * t + a1) * t
    return s * (1.0 - poly * jnp.exp(-z * z))


def _gelu_exact(x, erf_fn=_erf):
    # torch.nn.functional.gelu default ("exact", erf-based).
    return 0.5 * x * (1.0 + erf_fn(x * _INV_SQRT2))


def _effective_weight(weight_v, weight_g):
    """nn.utils.weight_norm(conv, name='weight', dim=2): w = g * v / ||v||,
    norm over all dims except dim 2 (the kernel-tap dim)."""
    v = weight_v.astype(jnp.float32)
    g = weight_g.astype(jnp.float32)
    v_norm = jnp.sqrt(jnp.sum(jnp.square(v), axis=(0, 1), keepdims=True))
    return g * v / v_norm                               # (C_out, C_in/groups, K)


def _round_up(x, m):
    return (x + m - 1) // m * m


def _vmem_bytes(shape, dtype):
    """Lane/sublane-padding-aware VMEM footprint estimate of one buffer."""
    itemsize = jnp.dtype(dtype).itemsize
    if not shape:
        return 8 * 128 * 4
    dims = list(shape)
    dims[-1] = _round_up(dims[-1], 128)
    if len(dims) >= 2:
        dims[-2] = _round_up(dims[-2], 8 * max(1, 4 // itemsize))
    n = 1
    for d in dims:
        n *= d
    return n * itemsize


def _conv_pos_kernel(x_ref, w_ref, b_ref, o_ref, *, num_taps, tile_t, n_sg, pcg):
    """One (batch, time-tile) grid step.

    x_ref: (t_x_pad, C)               zero-padded input, one batch element (bf16)
    w_ref: (num_taps, n_sg, pcg, pcg) weight-normed, block-diag packed conv
                                      weight (bf16), whole-array VMEM resident
    b_ref: (n_sg, 1, pcg)             bias (f32)
    o_ref: (tile_t, C)                lane-dense output tile
    """
    i = pl.program_id(1)
    t0 = pl.multiple_of(i * tile_t, 8)
    n_win = num_taps // 8                 # num_taps is padded to a multiple of 8

    for s in range(n_sg):                 # static: n_sg = groups // group_block
        col0 = s * pcg

        def tap_window(k8, acc, col0=col0):
            # One sublane-aligned (tile_t + 8)-row window covers 8 consecutive
            # taps; the per-tap 1-row shifts below act on in-register data, so
            # there is exactly one VMEM load per 8 taps (no misaligned ref
            # slices per tap).
            base = pl.multiple_of(t0 + k8 * 8, 8)
            win = x_ref[pl.ds(base, tile_t + 8), col0:col0 + pcg]
            for dk in range(8):           # static unroll inside the fori body
                xk = jax.lax.slice_in_dim(win, dk, dk + tile_t, axis=0)
                wk = w_ref[k8 * 8 + dk, s]                       # (pcg, pcg)
                acc = acc + jnp.dot(xk, wk,
                                    preferred_element_type=jnp.float32)
            return acc

        # Register-resident per-group-block f32 accumulator carried by the
        # fori_loop (e.g. (256, 96) f32 = 32 vregs), written once per tile.
        acc = jax.lax.fori_loop(0, n_win, tap_window,
                                jnp.zeros((tile_t, pcg), jnp.float32))

        y = _gelu_exact(acc + b_ref[s])                  # f32 bias + exact GELU
        # Partial lane write into the VMEM tile; the HBM-bound block stays the
        # full lane-dense (tile_t, C).
        o_ref[:, col0:col0 + pcg] = y.astype(o_ref.dtype)


def conv_pos_embedding(x, weight_v, weight_g, bias, *, kernel_size, groups,
                       group_block=2, tile_t=256, compute_dtype=jnp.bfloat16):
    """x: (B, T, C) -> (B, T, C), matching ConvolutionalPositionalEmbedding."""
    B, T, C = x.shape
    K, G = kernel_size, groups
    assert C % G == 0
    Cg = C // G
    assert weight_v.shape == (C, Cg, K)
    assert weight_g.shape == (1, 1, K)
    assert bias.shape == (C,)

    out_dtype = x.dtype
    cd_itemsize = jnp.dtype(compute_dtype).itemsize

    # ---- generation-aware VMEM budget ---------------------------------------
    try:
        vmem_cap = int(getattr(pltpu.get_tpu_info(), "vmem_capacity_bytes",
                               64 * 1024 * 1024))
    except Exception:
        vmem_cap = 64 * 1024 * 1024                     # conservative fallback

    # ---- group packing factor (block-diagonal MXU fattening) ----------------
    K_pad = _round_up(K, 8)                   # taps padded with zero weights
    gb = 1
    for d in range(max(1, min(group_block, G)), 0, -1):
        if G % d:
            continue
        w_bytes = _vmem_bytes((K_pad, G // d, d * Cg, d * Cg), compute_dtype)
        if d == 1 or w_bytes <= 0.45 * vmem_cap:
            gb = d
            break
    S = G // gb                               # number of packed "super-groups"
    PCg = gb * Cg                             # packed group width

    # ---- weight norm + block-diagonal packing (tiny; plain JAX) -------------
    w_eff = _effective_weight(weight_v, weight_g)                  # (C, Cg, K)
    w4 = jnp.transpose(w_eff.reshape(G, Cg, Cg, K), (3, 0, 2, 1))  # (K,G,ci,co)
    w4 = jnp.pad(w4, ((0, K_pad - K), (0, 0), (0, 0), (0, 0)))
    w5 = w4.reshape(K_pad, S, gb, Cg, Cg)
    eye = jnp.eye(gb, dtype=w5.dtype)[None, None, :, None, :, None]
    w_pack = (w5[:, :, :, :, None, :] * eye).reshape(K_pad, S, PCg, PCg)
    w_pack = w_pack.astype(compute_dtype)
    bias_pack = bias.astype(jnp.float32).reshape(S, 1, PCg)

    # ---- time tiling / padding (cdiv grid, no divisibility requirement) -----
    pad = K // 2
    t_conv = T + 2 * pad - K + 1              # conv output length (pre num_remove)
    tt = max(8, min(_round_up(tile_t, 8), _round_up(t_conv, 8)))
    n_t = pl.cdiv(t_conv, tt)
    t_out_pad = n_t * tt
    t_x_pad = t_out_pad + K_pad               # rows the aligned tap windows read

    x_pad = jnp.pad(x, ((0, 0), (pad, t_x_pad - pad - T), (0, 0)))
    x_pad = x_pad.astype(compute_dtype)       # bf16 MXU operands, f32 accumulate

    kernel = functools.partial(_conv_pos_kernel, num_taps=K_pad, tile_t=tt,
                               n_sg=S, pcg=PCg)

    # ---- cost / VMEM accounting (lane-padding aware) -------------------------
    flops = 2 * B * t_out_pad * K_pad * S * PCg * PCg   # incl. block-diag zeros
    transcendentals = B * t_out_pad * C
    bytes_accessed = (x_pad.size * cd_itemsize + w_pack.size * cd_itemsize
                      + bias_pack.size * 4
                      + B * t_out_pad * C * jnp.dtype(out_dtype).itemsize)

    est_vmem = (_vmem_bytes((K_pad, S, PCg, PCg), compute_dtype)   # 1x resident
                + _vmem_bytes((S, 1, PCg), jnp.float32)            # 1x resident
                + 2 * _vmem_bytes((t_x_pad, C), compute_dtype)     # 2x buffered
                + 2 * _vmem_bytes((tt, C), out_dtype)              # 2x buffered
                + 4 * _vmem_bytes((tt, PCg), jnp.float32)          # live values
                + 2 * 1024 * 1024)
    vmem_limit = int(min(max(32 * 1024 * 1024, 1.25 * est_vmem),
                         0.9 * vmem_cap))

    out_padded = pl.pallas_call(
        kernel,
        out_shape=jax.ShapeDtypeStruct((B, t_out_pad, C), out_dtype),
        grid=(B, n_t),
        in_specs=[
            # Whole padded sequence of one batch element, lane-dense; the block
            # index only depends on b, so it is re-fetched once per batch row.
            pl.BlockSpec((None, t_x_pad, C), lambda b, i: (b, 0, 0)),
            # Weights / bias: whole-array VMEM residents -> single-buffered and
            # DMA'd once per call (the pl.Buffered(1) behaviour the v7x budget
            # requires).
            pl.BlockSpec(memory_space=pltpu.MemorySpace.VMEM),
            pl.BlockSpec(memory_space=pltpu.MemorySpace.VMEM),
        ],
        out_specs=pl.BlockSpec((None, tt, C), lambda b, i: (b, i, 0)),
        compiler_params=pltpu.CompilerParams(
            dimension_semantics=("parallel", "parallel"),
            vmem_limit_bytes=vmem_limit),
        cost_estimate=pl.CostEstimate(
            flops=int(flops),
            transcendentals=int(transcendentals),
            bytes_accessed=int(bytes_accessed)),
    )(x_pad, w_pack, bias_pack)

    # Slicing to T drops the tile padding and, when kernel_size is even, the
    # extra frame the torch module removes (num_remove == 1).
    return out_padded[:, :T, :]


if __name__ == "__main__":
    # Small shapes consistent with the module: [batch, frame, feature].
    # kernel_size is even -> exercises the torch num_remove path.
    batch, frames, embed_dim, kernel_size, groups = 2, 16, 32, 4, 4
    pad = kernel_size // 2

    key = jax.random.PRNGKey(0)
    kx, kv, kg, kb = jax.random.split(key, 4)
    x = jax.random.normal(kx, (batch, frames, embed_dim), dtype=jnp.float32)
    weight_v = 0.5 * jax.random.normal(
        kv, (embed_dim, embed_dim // groups, kernel_size), dtype=jnp.float32)
    weight_g = jnp.abs(jax.random.normal(
        kg, (1, 1, kernel_size), dtype=jnp.float32)) + 0.5
    bias = 0.1 * jax.random.normal(kb, (embed_dim,), dtype=jnp.float32)

    out = conv_pos_embedding(x, weight_v, weight_g, bias,
                             kernel_size=kernel_size, groups=groups)
    out = jax.block_until_ready(out)
    assert out.shape == (batch, frames, embed_dim)

    # ---- plain-JAX f32 reference matching the PyTorch module ----------------
    w_eff = _effective_weight(weight_v, weight_g)              # (C, Cg, K)
    x_ncw = jnp.transpose(x, (0, 2, 1))                        # (B, C, T)
    conv = jax.lax.conv_general_dilated(
        x_ncw, w_eff, window_strides=(1,), padding=[(pad, pad)],
        dimension_numbers=("NCH", "OIH", "NCH"),
        feature_group_count=groups,
        precision=jax.lax.Precision.HIGHEST)
    conv = conv + bias[None, :, None]
    conv = conv[:, :, :frames]                                 # num_remove
    ref = jnp.transpose(_gelu_exact(conv, erf_fn=jax.lax.erf), (0, 2, 1))

    err = float(jnp.max(jnp.abs(out - ref)))
    # bf16 MXU operands vs f32 reference -> loose tolerance by design.
    assert jnp.allclose(out, ref, atol=2e-2, rtol=2e-2), f"max abs err={err}"
    print("KERNEL_OK")
</pallas_src>

<mosaic_0001>
module attributes {stable_mosaic.version = 11 : i64} {
  func.func @_conv_pos_kernel(%arg0: i32, %arg1: i32, %arg2: memref<1x32x32xbf16, #tpu.memory_space<vmem>>, %arg3: memref<8x2x16x16xbf16, #tpu.memory_space<vmem>>, %arg4: memref<2x1x16xf32, #tpu.memory_space<vmem>>, %arg5: memref<1x24x32xf32, #tpu.memory_space<vmem>>) attributes {dimension_semantics = [#tpu.dimension_semantics<parallel>, #tpu.dimension_semantics<parallel>], iteration_bounds = array<i64: 2, 1>, scalar_prefetch = 0 : i64, scratch_operands = 0 : i64, tpu.core_type = #tpu.core_type<tc>, window_params = [{transform_indices = @transform_0, window_bounds = array<i64: 1, 32, 32>}, {pipeline_mode = #tpu.pipeline_mode<synchronous>, transform_indices = @transform_1, window_bounds = array<i64: 8, 2, 16, 16>}, {pipeline_mode = #tpu.pipeline_mode<synchronous>, transform_indices = @transform_2, window_bounds = array<i64: 2, 1, 16>}, {transform_indices = @transform_3, window_bounds = array<i64: 1, 24, 32>}]} {
    %c24_i32 = arith.constant 24 : i32
    %0 = arith.muli %arg1, %c24_i32 : i32
    %1 = tpu.assume_multiple %0, 8 : i32
    %cst = arith.constant 0.000000e+00 : f32
    %2 = vector.broadcast %cst : f32 to vector<24x16xf32>
    %c0_i32 = arith.constant 0 : i32
    %c8_i32 = arith.constant 8 : i32
    %3 = arith.muli %c0_i32, %c8_i32 : i32
    %4 = arith.addi %1, %3 : i32
    %5 = tpu.assume_multiple %4, 8 : i32
    %c0 = arith.constant 0 : index
    %6 = arith.index_cast %5 : i32 to index
    %c0_0 = arith.constant 0 : index
    %7 = vector.load %arg2[%c0, %6, %c0_0] : memref<1x32x32xbf16, #tpu.memory_space<vmem>>, vector<1x32x16xbf16>
    %8 = vector.shape_cast %7 : vector<1x32x16xbf16> to vector<32x16xbf16>
    %9 = vector.extract_strided_slice %8 {offsets = [0, 0], sizes = [24, 16], strides = [1, 1]} : vector<32x16xbf16> to vector<24x16xbf16>
    %c8_i32_1 = arith.constant 8 : i32
    %10 = arith.muli %c0_i32, %c8_i32_1 : i32
    %c0_i32_2 = arith.constant 0 : i32
    %11 = arith.addi %10, %c0_i32_2 : i32
    %12 = arith.index_cast %11 : i32 to index
    %c0_3 = arith.constant 0 : index
    %c0_4 = arith.constant 0 : index
    %c0_5 = arith.constant 0 : index
    %13 = vector.load %arg3[%12, %c0_3, %c0_4, %c0_5] : memref<8x2x16x16xbf16, #tpu.memory_space<vmem>>, vector<1x1x16x16xbf16>
    %14 = vector.shape_cast %13 : vector<1x1x16x16xbf16> to vector<16x16xbf16>
    %cst_6 = arith.constant dense<0.000000e+00> : vector<24x16xf32>
    %15 = tpu.matmul %9, %14, %cst_6 {dimension_numbers = #tpu.dot_dimension_numbers<[1], [0], [0], [1], [0, 0, 1, 1], [], []>} : vector<24x16xbf16>, vector<16x16xbf16>, vector<24x16xf32> -> vector<24x16xf32>
    %16 = arith.addf %2, %15 : vector<24x16xf32>
    %17 = vector.extract_strided_slice %8 {offsets = [1, 0], sizes = [24, 16], strides = [1, 1]} : vector<32x16xbf16> to vector<24x16xbf16>
    %c8_i32_7 = arith.constant 8 : i32
    %18 = arith.muli %c0_i32, %c8_i32_7 : i32
    %c1_i32 = arith.constant 1 : i32
    %19 = arith.addi %18, %c1_i32 : i32
    %20 = arith.index_cast %19 : i32 to index
    %c0_8 = arith.constant 0 : index
    %c0_9 = arith.constant 0 : index
    %c0_10 = arith.constant 0 : index
    %21 = vector.load %arg3[%20, %c0_8, %c0_9, %c0_10] : memref<8x2x16x16xbf16, #tpu.memory_space<vmem>>, vector<1x1x16x16xbf16>
    %22 = vector.shape_cast %21 : vector<1x1x16x16xbf16> to vector<16x16xbf16>
    %cst_11 = arith.constant dense<0.000000e+00> : vector<24x16xf32>
    %23 = tpu.matmul %17, %22, %cst_11 {dimension_numbers = #tpu.dot_dimension_numbers<[1], [0], [0], [1], [0, 0, 1, 1], [], []>} : vector<24x16xbf16>, vector<16x16xbf16>, vector<24x16xf32> -> vector<24x16xf32>
    %24 = arith.addf %16, %23 : vector<24x16xf32>
    %25 = vector.extract_strided_slice %8 {offsets = [2, 0], sizes = [24, 16], strides = [1, 1]} : vector<32x16xbf16> to vector<24x16xbf16>
    %c8_i32_12 = arith.constant 8 : i32
    %26 = arith.muli %c0_i32, %c8_i32_12 : i32
    %c2_i32 = arith.constant 2 : i32
    %27 = arith.addi %26, %c2_i32 : i32
    %28 = arith.index_cast %27 : i32 to index
    %c0_13 = arith.constant 0 : index
    %c0_14 = arith.constant 0 : index
    %c0_15 = arith.constant 0 : index
    %29 = vector.load %arg3[%28, %c0_13, %c0_14, %c0_15] : memref<8x2x16x16xbf16, #tpu.memory_space<vmem>>, vector<1x1x16x16xbf16>
    %30 = vector.shape_cast %29 : vector<1x1x16x16xbf16> to vector<16x16xbf16>
    %cst_16 = arith.constant dense<0.000000e+00> : vector<24x16xf32>
    %31 = tpu.matmul %25, %30, %cst_16 {dimension_numbers = #tpu.dot_dimension_numbers<[1], [0], [0], [1], [0, 0, 1, 1], [], []>} : vector<24x16xbf16>, vector<16x16xbf16>, vector<24x16xf32> -> vector<24x16xf32>
    %32 = arith.addf %24, %31 : vector<24x16xf32>
    %33 = vector.extract_strided_slice %8 {offsets = [3, 0], sizes = [24, 16], strides = [1, 1]} : vector<32x16xbf16> to vector<24x16xbf16>
    %c8_i32_17 = arith.constant 8 : i32
    %34 = arith.muli %c0_i32, %c8_i32_17 : i32
    %c3_i32 = arith.constant 3 : i32
    %35 = arith.addi %34, %c3_i32 : i32
    %36 = arith.index_cast %35 : i32 to index
    %c0_18 = arith.constant 0 : index
    %c0_19 = arith.constant 0 : index
    %c0_20 = arith.constant 0 : index
    %37 = vector.load %arg3[%36, %c0_18, %c0_19, %c0_20] : memref<8x2x16x16xbf16, #tpu.memory_space<vmem>>, vector<1x1x16x16xbf16>
    %38 = vector.shape_cast %37 : vector<1x1x16x16xbf16> to vector<16x16xbf16>
    %cst_21 = arith.constant dense<0.000000e+00> : vector<24x16xf32>
    %39 = tpu.matmul %33, %38, %cst_21 {dimension_numbers = #tpu.dot_dimension_numbers<[1], [0], [0], [1], [0, 0, 1, 1], [], []>} : vector<24x16xbf16>, vector<16x16xbf16>, vector<24x16xf32> -> vector<24x16xf32>
    %40 = arith.addf %32, %39 : vector<24x16xf32>
    %41 = vector.extract_strided_slice %8 {offsets = [4, 0], sizes = [24, 16], strides = [1, 1]} : vector<32x16xbf16> to vector<24x16xbf16>
    %c8_i32_22 = arith.constant 8 : i32
    %42 = arith.muli %c0_i32, %c8_i32_22 : i32
    %c4_i32 = arith.constant 4 : i32
    %43 = arith.addi %42, %c4_i32 : i32
    %44 = arith.index_cast %43 : i32 to index
    %c0_23 = arith.constant 0 : index
    %c0_24 = arith.constant 0 : index
    %c0_25 = arith.constant 0 : index
    %45 = vector.load %arg3[%44, %c0_23, %c0_24, %c0_25] : memref<8x2x16x16xbf16, #tpu.memory_space<vmem>>, vector<1x1x16x16xbf16>
    %46 = vector.shape_cast %45 : vector<1x1x16x16xbf16> to vector<16x16xbf16>
    %cst_26 = arith.constant dense<0.000000e+00> : vector<24x16xf32>
    %47 = tpu.matmul %41, %46, %cst_26 {dimension_numbers = #tpu.dot_dimension_numbers<[1], [0], [0], [1], [0, 0, 1, 1], [], []>} : vector<24x16xbf16>, vector<16x16xbf16>, vector<24x16xf32> -> vector<24x16xf32>
    %48 = arith.addf %40, %47 : vector<24x16xf32>
    %49 = vector.extract_strided_slice %8 {offsets = [5, 0], sizes = [24, 16], strides = [1, 1]} : vector<32x16xbf16> to vector<24x16xbf16>
    %c8_i32_27 = arith.constant 8 : i32
    %50 = arith.muli %c0_i32, %c8_i32_27 : i32
    %c5_i32 = arith.constant 5 : i32
    %51 = arith.addi %50, %c5_i32 : i32
    %52 = arith.index_cast %51 : i32 to index
    %c0_28 = arith.constant 0 : index
    %c0_29 = arith.constant 0 : index
    %c0_30 = arith.constant 0 : index
    %53 = vector.load %arg3[%52, %c0_28, %c0_29, %c0_30] : memref<8x2x16x16xbf16, #tpu.memory_space<vmem>>, vector<1x1x16x16xbf16>
    %54 = vector.shape_cast %53 : vector<1x1x16x16xbf16> to vector<16x16xbf16>
    %cst_31 = arith.constant dense<0.000000e+00> : vector<24x16xf32>
    %55 = tpu.matmul %49, %54, %cst_31 {dimension_numbers = #tpu.dot_dimension_numbers<[1], [0], [0], [1], [0, 0, 1, 1], [], []>} : vector<24x16xbf16>, vector<16x16xbf16>, vector<24x16xf32> -> vector<24x16xf32>
    %56 = arith.addf %48, %55 : vector<24x16xf32>
    %57 = vector.extract_strided_slice %8 {offsets = [6, 0], sizes = [24, 16], strides = [1, 1]} : vector<32x16xbf16> to vector<24x16xbf16>
    %c8_i32_32 = arith.constant 8 : i32
    %58 = arith.muli %c0_i32, %c8_i32_32 : i32
    %c6_i32 = arith.constant 6 : i32
    %59 = arith.addi %58, %c6_i32 : i32
    %60 = arith.index_cast %59 : i32 to index
    %c0_33 = arith.constant 0 : index
    %c0_34 = arith.constant 0 : index
    %c0_35 = arith.constant 0 : index
    %61 = vector.load %arg3[%60, %c0_33, %c0_34, %c0_35] : memref<8x2x16x16xbf16, #tpu.memory_space<vmem>>, vector<1x1x16x16xbf16>
    %62 = vector.shape_cast %61 : vector<1x1x16x16xbf16> to vector<16x16xbf16>
    %cst_36 = arith.constant dense<0.000000e+00> : vector<24x16xf32>
    %63 = tpu.matmul %57, %62, %cst_36 {dimension_numbers = #tpu.dot_dimension_numbers<[1], [0], [0], [1], [0, 0, 1, 1], [], []>} : vector<24x16xbf16>, vector<16x16xbf16>, vector<24x16xf32> -> vector<24x16xf32>
    %64 = arith.addf %56, %63 : vector<24x16xf32>
    %65 = vector.extract_strided_slice %8 {offsets = [7, 0], sizes = [24, 16], strides = [1, 1]} : vector<32x16xbf16> to vector<24x16xbf16>
    %c8_i32_37 = arith.constant 8 : i32
    %66 = arith.muli %c0_i32, %c8_i32_37 : i32
    %c7_i32 = arith.constant 7 : i32
    %67 = arith.addi %66, %c7_i32 : i32
    %68 = arith.index_cast %67 : i32 to index
    %c0_38 = arith.constant 0 : index
    %c0_39 = arith.constant 0 : index
    %c0_40 = arith.constant 0 : index
    %69 = vector.load %arg3[%68, %c0_38, %c0_39, %c0_40] : memref<8x2x16x16xbf16, #tpu.memory_space<vmem>>, vector<1x1x16x16xbf16>
    %70 = vector.shape_cast %69 : vector<1x1x16x16xbf16> to vector<16x16xbf16>
    %cst_41 = arith.constant dense<0.000000e+00> : vector<24x16xf32>
    %71 = tpu.matmul %65, %70, %cst_41 {dimension_numbers = #tpu.dot_dimension_numbers<[1], [0], [0], [1], [0, 0, 1, 1], [], []>} : vector<24x16xbf16>, vector<16x16xbf16>, vector<24x16xf32> -> vector<24x16xf32>
    %72 = arith.addf %64, %71 : vector<24x16xf32>
    %c1_i32_42 = arith.constant 1 : i32
    %c0_43 = arith.constant 0 : index
    %c0_44 = arith.constant 0 : index
    %c0_45 = arith.constant 0 : index
    %73 = vector.load %arg4[%c0_43, %c0_44, %c0_45] : memref<2x1x16xf32, #tpu.memory_space<vmem>>, vector<1x1x16xf32>
    %74 = vector.shape_cast %73 : vector<1x1x16xf32> to vector<1x16xf32>
    %75 = vector.broadcast %74 : vector<1x16xf32> to vector<24x16xf32>
    %76 = arith.addf %72, %75 : vector<24x16xf32>
    %cst_46 = arith.constant 5.000000e-01 : f32
    %77 = vector.broadcast %cst_46 : f32 to vector<24x16xf32>
    %78 = arith.mulf %77, %76 : vector<24x16xf32>
    %cst_47 = arith.constant 0.707106769 : f32
    %79 = vector.broadcast %cst_47 : f32 to vector<24x16xf32>
    %80 = arith.mulf %76, %79 : vector<24x16xf32>
    %cst_48 = arith.constant 0.000000e+00 : f32
    %81 = vector.broadcast %cst_48 : f32 to vector<24x16xf32>
    %82 = arith.cmpf olt, %80, %81 : vector<24x16xf32>
    %cst_49 = arith.constant -1.000000e+00 : f32
    %cst_50 = arith.constant 1.000000e+00 : f32
    %83 = vector.broadcast %cst_49 : f32 to vector<24x16xf32>
    %84 = vector.broadcast %cst_50 : f32 to vector<24x16xf32>
    %85 = arith.select %82, %83, %84 : vector<24x16xi1>, vector<24x16xf32>
    %86 = math.absf %80 : vector<24x16xf32>
    %cst_51 = arith.constant 0.327591091 : f32
    %87 = vector.broadcast %cst_51 : f32 to vector<24x16xf32>
    %88 = arith.mulf %87, %86 : vector<24x16xf32>
    %cst_52 = arith.constant 1.000000e+00 : f32
    %89 = vector.broadcast %cst_52 : f32 to vector<24x16xf32>
    %90 = arith.addf %89, %88 : vector<24x16xf32>
    %cst_53 = arith.constant 1.000000e+00 : f32
    %91 = vector.broadcast %cst_53 : f32 to vector<24x16xf32>
    %92 = arith.divf %91, %90 : vector<24x16xf32>
    %cst_54 = arith.constant 1.06140542 : f32
    %93 = vector.broadcast %cst_54 : f32 to vector<24x16xf32>
    %94 = arith.mulf %93, %92 : vector<24x16xf32>
    %cst_55 = arith.constant -1.45315206 : f32
    %95 = vector.broadcast %cst_55 : f32 to vector<24x16xf32>
    %96 = arith.addf %94, %95 : vector<24x16xf32>
    %97 = arith.mulf %96, %92 : vector<24x16xf32>
    %cst_56 = arith.constant 1.42141378 : f32
    %98 = vector.broadcast %cst_56 : f32 to vector<24x16xf32>
    %99 = arith.addf %97, %98 : vector<24x16xf32>
    %100 = arith.mulf %99, %92 : vector<24x16xf32>
    %cst_57 = arith.constant -0.284496725 : f32
    %101 = vector.broadcast %cst_57 : f32 to vector<24x16xf32>
    %102 = arith.addf %100, %101 : vector<24x16xf32>
    %103 = arith.mulf %102, %92 : vector<24x16xf32>
    %cst_58 = arith.constant 0.254829586 : f32
    %104 = vector.broadcast %cst_58 : f32 to vector<24x16xf32>
    %105 = arith.addf %103, %104 : vector<24x16xf32>
    %106 = arith.mulf %105, %92 : vector<24x16xf32>
    %cst_59 = arith.constant 0.000000e+00 : f32
    %107 = vector.broadcast %cst_59 : f32 to vector<24x16xf32>
    %108 = arith.subf %107, %86 : vector<24x16xf32>
    %109 = arith.mulf %108, %86 : vector<24x16xf32>
    %110 = math.exp %109 : vector<24x16xf32>
    %111 = arith.mulf %106, %110 : vector<24x16xf32>
    %cst_60 = arith.constant 1.000000e+00 : f32
    %112 = vector.broadcast %cst_60 : f32 to vector<24x16xf32>
    %113 = arith.subf %112, %111 : vector<24x16xf32>
    %114 = arith.mulf %85, %113 : vector<24x16xf32>
    %cst_61 = arith.constant 1.000000e+00 : f32
    %115 = vector.broadcast %cst_61 : f32 to vector<24x16xf32>
    %116 = arith.addf %115, %114 : vector<24x16xf32>
    %117 = arith.mulf %78, %116 : vector<24x16xf32>
    %c0_62 = arith.constant 0 : index
    %c0_63 = arith.constant 0 : index
    %c0_64 = arith.constant 0 : index
    %118 = vector.load %arg5[%c0_62, %c0_63, %c0_64] : memref<1x24x32xf32, #tpu.memory_space<vmem>>, vector<1x24x16xf32>
    %119 = vector.shape_cast %118 : vector<1x24x16xf32> to vector<24x16xf32>
    %120 = vector.shape_cast %117 : vector<24x16xf32> to vector<1x24x16xf32>
    tpu.vector_store %arg5[%c0_62, %c0_63, %c0_64], %120 {strides = array<i32>} : memref<1x24x32xf32, #tpu.memory_space<vmem>>, vector<1x24x16xf32>,
    %cst_65 = arith.constant 0.000000e+00 : f32
    %121 = vector.broadcast %cst_65 : f32 to vector<24x16xf32>
    %c0_i32_66 = arith.constant 0 : i32
    %c8_i32_67 = arith.constant 8 : i32
    %122 = arith.muli %c0_i32_66, %c8_i32_67 : i32
    %123 = arith.addi %1, %122 : i32
    %124 = tpu.assume_multiple %123, 8 : i32
    %c0_68 = arith.constant 0 : index
    %125 = arith.index_cast %124 : i32 to index
    %c16 = arith.constant 16 : index
    %126 = vector.load %arg2[%c0_68, %125, %c16] : memref<1x32x32xbf16, #tpu.memory_space<vmem>>, vector<1x32x16xbf16>
    %127 = vector.shape_cast %126 : vector<1x32x16xbf16> to vector<32x16xbf16>
    %128 = vector.extract_strided_slice %127 {offsets = [0, 0], sizes = [24, 16], strides = [1, 1]} : vector<32x16xbf16> to vector<24x16xbf16>
    %c8_i32_69 = arith.constant 8 : i32
    %129 = arith.muli %c0_i32_66, %c8_i32_69 : i32
    %c0_i32_70 = arith.constant 0 : i32
    %130 = arith.addi %129, %c0_i32_70 : i32
    %131 = arith.index_cast %130 : i32 to index
    %c1 = arith.constant 1 : index
    %c0_71 = arith.constant 0 : index
    %c0_72 = arith.constant 0 : index
    %132 = vector.load %arg3[%131, %c1, %c0_71, %c0_72] : memref<8x2x16x16xbf16, #tpu.memory_space<vmem>>, vector<1x1x16x16xbf16>
    %133 = vector.shape_cast %132 : vector<1x1x16x16xbf16> to vector<16x16xbf16>
    %cst_73 = arith.constant dense<0.000000e+00> : vector<24x16xf32>
    %134 = tpu.matmul %128, %133, %cst_73 {dimension_numbers = #tpu.dot_dimension_numbers<[1], [0], [0], [1], [0, 0, 1, 1], [], []>} : vector<24x16xbf16>, vector<16x16xbf16>, vector<24x16xf32> -> vector<24x16xf32>
    %135 = arith.addf %121, %134 : vector<24x16xf32>
    %136 = vector.extract_strided_slice %127 {offsets = [1, 0], sizes = [24, 16], strides = [1, 1]} : vector<32x16xbf16> to vector<24x16xbf16>
    %c8_i32_74 = arith.constant 8 : i32
    %137 = arith.muli %c0_i32_66, %c8_i32_74 : i32
    %c1_i32_75 = arith.constant 1 : i32
    %138 = arith.addi %137, %c1_i32_75 : i32
    %139 = arith.index_cast %138 : i32 to index
    %c1_76 = arith.constant 1 : index
    %c0_77 = arith.constant 0 : index
    %c0_78 = arith.constant 0 : index
    %140 = vector.load %arg3[%139, %c1_76, %c0_77, %c0_78] : memref<8x2x16x16xbf16, #tpu.memory_space<vmem>>, vector<1x1x16x16xbf16>
    %141 = vector.shape_cast %140 : vector<1x1x16x16xbf16> to vector<16x16xbf16>
    %cst_79 = arith.constant dense<0.000000e+00> : vector<24x16xf32>
    %142 = tpu.matmul %136, %141, %cst_79 {dimension_numbers = #tpu.dot_dimension_numbers<[1], [0], [0], [1], [0, 0, 1, 1], [], []>} : vector<24x16xbf16>, vector<16x16xbf16>, vector<24x16xf32> -> vector<24x16xf32>
    %143 = arith.addf %135, %142 : vector<24x16xf32>
    %144 = vector.extract_strided_slice %127 {offsets = [2, 0], sizes = [24, 16], strides = [1, 1]} : vector<32x16xbf16> to vector<24x16xbf16>
    %c8_i32_80 = arith.constant 8 : i32
    %145 = arith.muli %c0_i32_66, %c8_i32_80 : i32
    %c2_i32_81 = arith.constant 2 : i32
    %146 = arith.addi %145, %c2_i32_81 : i32
    %147 = arith.index_cast %146 : i32 to index
    %c1_82 = arith.constant 1 : index
    %c0_83 = arith.constant 0 : index
    %c0_84 = arith.constant 0 : index
    %148 = vector.load %arg3[%147, %c1_82, %c0_83, %c0_84] : memref<8x2x16x16xbf16, #tpu.memory_space<vmem>>, vector<1x1x16x16xbf16>
    %149 = vector.shape_cast %148 : vector<1x1x16x16xbf16> to vector<16x16xbf16>
    %cst_85 = arith.constant dense<0.000000e+00> : vector<24x16xf32>
    %150 = tpu.matmul %144, %149, %cst_85 {dimension_numbers = #tpu.dot_dimension_numbers<[1], [0], [0], [1], [0, 0, 1, 1], [], []>} : vector<24x16xbf16>, vector<16x16xbf16>, vector<24x16xf32> -> vector<24x16xf32>
    %151 = arith.addf %143, %150 : vector<24x16xf32>
    %152 = vector.extract_strided_slice %127 {offsets = [3, 0], sizes = [24, 16], strides = [1, 1]} : vector<32x16xbf16> to vector<24x16xbf16>
    %c8_i32_86 = arith.constant 8 : i32
    %153 = arith.muli %c0_i32_66, %c8_i32_86 : i32
    %c3_i32_87 = arith.constant 3 : i32
    %154 = arith.addi %153, %c3_i32_87 : i32
    %155 = arith.index_cast %154 : i32 to index
    %c1_88 = arith.constant 1 : index
    %c0_89 = arith.constant 0 : index
    %c0_90 = arith.constant 0 : index
    %156 = vector.load %arg3[%155, %c1_88, %c0_89, %c0_90] : memref<8x2x16x16xbf16, #tpu.memory_space<vmem>>, vector<1x1x16x16xbf16>
    %157 = vector.shape_cast %156 : vector<1x1x16x16xbf16> to vector<16x16xbf16>
    %cst_91 = arith.constant dense<0.000000e+00> : vector<24x16xf32>
    %158 = tpu.matmul %152, %157, %cst_91 {dimension_numbers = #tpu.dot_dimension_numbers<[1], [0], [0], [1], [0, 0, 1, 1], [], []>} : vector<24x16xbf16>, vector<16x16xbf16>, vector<24x16xf32> -> vector<24x16xf32>
    %159 = arith.addf %151, %158 : vector<24x16xf32>
    %160 = vector.extract_strided_slice %127 {offsets = [4, 0], sizes = [24, 16], strides = [1, 1]} : vector<32x16xbf16> to vector<24x16xbf16>
    %c8_i32_92 = arith.constant 8 : i32
    %161 = arith.muli %c0_i32_66, %c8_i32_92 : i32
    %c4_i32_93 = arith.constant 4 : i32
    %162 = arith.addi %161, %c4_i32_93 : i32
    %163 = arith.index_cast %162 : i32 to index
    %c1_94 = arith.constant 1 : index
    %c0_95 = arith.constant 0 : index
    %c0_96 = arith.constant 0 : index
    %164 = vector.load %arg3[%163, %c1_94, %c0_95, %c0_96] : memref<8x2x16x16xbf16, #tpu.memory_space<vmem>>, vector<1x1x16x16xbf16>
    %165 = vector.shape_cast %164 : vector<1x1x16x16xbf16> to vector<16x16xbf16>
    %cst_97 = arith.constant dense<0.000000e+00> : vector<24x16xf32>
    %166 = tpu.matmul %160, %165, %cst_97 {dimension_numbers = #tpu.dot_dimension_numbers<[1], [0], [0], [1], [0, 0, 1, 1], [], []>} : vector<24x16xbf16>, vector<16x16xbf16>, vector<24x16xf32> -> vector<24x16xf32>
    %167 = arith.addf %159, %166 : vector<24x16xf32>
    %168 = vector.extract_strided_slice %127 {offsets = [5, 0], sizes = [24, 16], strides = [1, 1]} : vector<32x16xbf16> to vector<24x16xbf16>
    %c8_i32_98 = arith.constant 8 : i32
    %169 = arith.muli %c0_i32_66, %c8_i32_98 : i32
    %c5_i32_99 = arith.constant 5 : i32
    %170 = arith.addi %169, %c5_i32_99 : i32
    %171 = arith.index_cast %170 : i32 to index
    %c1_100 = arith.constant 1 : index
    %c0_101 = arith.constant 0 : index
    %c0_102 = arith.constant 0 : index
    %172 = vector.load %arg3[%171, %c1_100, %c0_101, %c0_102] : memref<8x2x16x16xbf16, #tpu.memory_space<vmem>>, vector<1x1x16x16xbf16>
    %173 = vector.shape_cast %172 : vector<1x1x16x16xbf16> to vector<16x16xbf16>
    %cst_103 = arith.constant dense<0.000000e+00> : vector<24x16xf32>
    %174 = tpu.matmul %168, %173, %cst_103 {dimension_numbers = #tpu.dot_dimension_numbers<[1], [0], [0], [1], [0, 0, 1, 1], [], []>} : vector<24x16xbf16>, vector<16x16xbf16>, vector<24x16xf32> -> vector<24x16xf32>
    %175 = arith.addf %167, %174 : vector<24x16xf32>
    %176 = vector.extract_strided_slice %127 {offsets = [6, 0], sizes = [24, 16], strides = [1, 1]} : vector<32x16xbf16> to vector<24x16xbf16>
    %c8_i32_104 = arith.constant 8 : i32
    %177 = arith.muli %c0_i32_66, %c8_i32_104 : i32
    %c6_i32_105 = arith.constant 6 : i32
    %178 = arith.addi %177, %c6_i32_105 : i32
    %179 = arith.index_cast %178 : i32 to index
    %c1_106 = arith.constant 1 : index
    %c0_107 = arith.constant 0 : index
    %c0_108 = arith.constant 0 : index
    %180 = vector.load %arg3[%179, %c1_106, %c0_107, %c0_108] : memref<8x2x16x16xbf16, #tpu.memory_space<vmem>>, vector<1x1x16x16xbf16>
    %181 = vector.shape_cast %180 : vector<1x1x16x16xbf16> to vector<16x16xbf16>
    %cst_109 = arith.constant dense<0.000000e+00> : vector<24x16xf32>
    %182 = tpu.matmul %176, %181, %cst_109 {dimension_numbers = #tpu.dot_dimension_numbers<[1], [0], [0], [1], [0, 0, 1, 1], [], []>} : vector<24x16xbf16>, vector<16x16xbf16>, vector<24x16xf32> -> vector<24x16xf32>
    %183 = arith.addf %175, %182 : vector<24x16xf32>
    %184 = vector.extract_strided_slice %127 {offsets = [7, 0], sizes = [24, 16], strides = [1, 1]} : vector<32x16xbf16> to vector<24x16xbf16>
    %c8_i32_110 = arith.constant 8 : i32
    %185 = arith.muli %c0_i32_66, %c8_i32_110 : i32
    %c7_i32_111 = arith.constant 7 : i32
    %186 = arith.addi %185, %c7_i32_111 : i32
    %187 = arith.index_cast %186 : i32 to index
    %c1_112 = arith.constant 1 : index
    %c0_113 = arith.constant 0 : index
    %c0_114 = arith.constant 0 : index
    %188 = vector.load %arg3[%187, %c1_112, %c0_113, %c0_114] : memref<8x2x16x16xbf16, #tpu.memory_space<vmem>>, vector<1x1x16x16xbf16>
    %189 = vector.shape_cast %188 : vector<1x1x16x16xbf16> to vector<16x16xbf16>
    %cst_115 = arith.constant dense<0.000000e+00> : vector<24x16xf32>
    %190 = tpu.matmul %184, %189, %cst_115 {dimension_numbers = #tpu.dot_dimension_numbers<[1], [0], [0], [1], [0, 0, 1, 1], [], []>} : vector<24x16xbf16>, vector<16x16xbf16>, vector<24x16xf32> -> vector<24x16xf32>
    %191 = arith.addf %183, %190 : vector<24x16xf32>
    %c1_i32_116 = arith.constant 1 : i32
    %c1_117 = arith.constant 1 : index
    %c0_118 = arith.constant 0 : index
    %c0_119 = arith.constant 0 : index
    %192 = vector.load %arg4[%c1_117, %c0_118, %c0_119] : memref<2x1x16xf32, #tpu.memory_space<vmem>>, vector<1x1x16xf32>
    %193 = vector.shape_cast %192 : vector<1x1x16xf32> to vector<1x16xf32>
    %194 = vector.broadcast %193 : vector<1x16xf32> to vector<24x16xf32>
    %195 = arith.addf %191, %194 : vector<24x16xf32>
    %cst_120 = arith.constant 5.000000e-01 : f32
    %196 = vector.broadcast %cst_120 : f32 to vector<24x16xf32>
    %197 = arith.mulf %196, %195 : vector<24x16xf32>
    %cst_121 = arith.constant 0.707106769 : f32
    %198 = vector.broadcast %cst_121 : f32 to vector<24x16xf32>
    %199 = arith.mulf %195, %198 : vector<24x16xf32>
    %cst_122 = arith.constant 0.000000e+00 : f32
    %200 = vector.broadcast %cst_122 : f32 to vector<24x16xf32>
    %201 = arith.cmpf olt, %199, %200 : vector<24x16xf32>
    %cst_123 = arith.constant -1.000000e+00 : f32
    %cst_124 = arith.constant 1.000000e+00 : f32
    %202 = vector.broadcast %cst_123 : f32 to vector<24x16xf32>
    %203 = vector.broadcast %cst_124 : f32 to vector<24x16xf32>
    %204 = arith.select %201, %202, %203 : vector<24x16xi1>, vector<24x16xf32>
    %205 = math.absf %199 : vector<24x16xf32>
    %cst_125 = arith.constant 0.327591091 : f32
    %206 = vector.broadcast %cst_125 : f32 to vector<24x16xf32>
    %207 = arith.mulf %206, %205 : vector<24x16xf32>
    %cst_126 = arith.constant 1.000000e+00 : f32
    %208 = vector.broadcast %cst_126 : f32 to vector<24x16xf32>
    %209 = arith.addf %208, %207 : vector<24x16xf32>
    %cst_127 = arith.constant 1.000000e+00 : f32
    %210 = vector.broadcast %cst_127 : f32 to vector<24x16xf32>
    %211 = arith.divf %210, %209 : vector<24x16xf32>
    %cst_128 = arith.constant 1.06140542 : f32
    %212 = vector.broadcast %cst_128 : f32 to vector<24x16xf32>
    %213 = arith.mulf %212, %211 : vector<24x16xf32>
    %cst_129 = arith.constant -1.45315206 : f32
    %214 = vector.broadcast %cst_129 : f32 to vector<24x16xf32>
    %215 = arith.addf %213, %214 : vector<24x16xf32>
    %216 = arith.mulf %215, %211 : vector<24x16xf32>
    %cst_130 = arith.constant 1.42141378 : f32
    %217 = vector.broadcast %cst_130 : f32 to vector<24x16xf32>
    %218 = arith.addf %216, %217 : vector<24x16xf32>
    %219 = arith.mulf %218, %211 : vector<24x16xf32>
    %cst_131 = arith.constant -0.284496725 : f32
    %220 = vector.broadcast %cst_131 : f32 to vector<24x16xf32>
    %221 = arith.addf %219, %220 : vector<24x16xf32>
    %222 = arith.mulf %221, %211 : vector<24x16xf32>
    %cst_132 = arith.constant 0.254829586 : f32
    %223 = vector.broadcast %cst_132 : f32 to vector<24x16xf32>
    %224 = arith.addf %222, %223 : vector<24x16xf32>
    %225 = arith.mulf %224, %211 : vector<24x16xf32>
    %cst_133 = arith.constant 0.000000e+00 : f32
    %226 = vector.broadcast %cst_133 : f32 to vector<24x16xf32>
    %227 = arith.subf %226, %205 : vector<24x16xf32>
    %228 = arith.mulf %227, %205 : vector<24x16xf32>
    %229 = math.exp %228 : vector<24x16xf32>
    %230 = arith.mulf %225, %229 : vector<24x16xf32>
    %cst_134 = arith.constant 1.000000e+00 : f32
    %231 = vector.broadcast %cst_134 : f32 to vector<24x16xf32>
    %232 = arith.subf %231, %230 : vector<24x16xf32>
    %233 = arith.mulf %204, %232 : vector<24x16xf32>
    %cst_135 = arith.constant 1.000000e+00 : f32
    %234 = vector.broadcast %cst_135 : f32 to vector<24x16xf32>
    %235 = arith.addf %234, %233 : vector<24x16xf32>
    %236 = arith.mulf %197, %235 : vector<24x16xf32>
    %c0_136 = arith.constant 0 : index
    %c0_137 = arith.constant 0 : index
    %c16_138 = arith.constant 16 : index
    %237 = vector.load %arg5[%c0_136, %c0_137, %c16_138] : memref<1x24x32xf32, #tpu.memory_space<vmem>>, vector<1x24x16xf32>
    %238 = vector.shape_cast %237 : vector<1x24x16xf32> to vector<24x16xf32>
    %239 = vector.shape_cast %236 : vector<24x16xf32> to vector<1x24x16xf32>
    tpu.vector_store %arg5[%c0_136, %c0_137, %c16_138], %239 {strides = array<i32>} : memref<1x24x32xf32, #tpu.memory_space<vmem>>, vector<1x24x16xf32>,
    return
  }
  func.func @transform_0(%arg0: i32, %arg1: i32) -> (i32, i32, i32) {
    %c0_i32 = arith.constant 0 : i32
    %c0_i32_0 = arith.constant 0 : i32
    %c0_i32_1 = arith.constant 0 : i32
    return %arg0, %c0_i32, %c0_i32_0 : i32, i32, i32
  }
  func.func @transform_1(%arg0: i32, %arg1: i32) -> (i32, i32, i32, i32) {
    %c0_i32 = arith.constant 0 : i32
    %c0_i32_0 = arith.constant 0 : i32
    %c0_i32_1 = arith.constant 0 : i32
    %c0_i32_2 = arith.constant 0 : i32
    %c0_i32_3 = arith.constant 0 : i32
    return %c0_i32, %c0_i32_0, %c0_i32_1, %c0_i32_2 : i32, i32, i32, i32
  }
  func.func @transform_2(%arg0: i32, %arg1: i32) -> (i32, i32, i32) {
    %c0_i32 = arith.constant 0 : i32
    %c0_i32_0 = arith.constant 0 : i32
    %c0_i32_1 = arith.constant 0 : i32
    %c0_i32_2 = arith.constant 0 : i32
    return %c0_i32, %c0_i32_0, %c0_i32_1 : i32, i32, i32
  }
  func.func @transform_3(%arg0: i32, %arg1: i32) -> (i32, i32, i32) {
    %c0_i32 = arith.constant 0 : i32
    %c0_i32_0 = arith.constant 0 : i32
    return %arg0, %arg1, %c0_i32 : i32, i32, i32
  }
}

</mosaic_0001>

<llo_original>
// kernel: tpu_custom_call.1
$region0: #{tpu_custom_call.1}
  #allocation0 [shape = 'u32[]', space=smem, size = 0x4, offset = 0x4, fixed_abs, tag = 'smem constant byte address 0x4 - core index']
  #allocation1 [shape = 'u32[144,128]{1,0:T(1,128)}', space=vmem, size = 0x12000, scoped, tag = 'internal scratch']
  %s0 = inlined_call_operand.hbm [shape: bf16[2,32,32], index: 0, kind: input, shape index: {}]
  %s1 = inlined_call_operand.hbm [shape: bf16[8,2,16,16], index: 1, kind: input, shape index: {}]
  %s2 = inlined_call_operand.vmem [shape: f32[2,1,16], index: 2, kind: input, shape index: {}]
  %s3 = inlined_call_operand.hbm [shape: f32[2,24,32], index: 3, kind: output, shape index: {}]
  %s4 = sld [smem:[#allocation0]]
  $region53: #{tpu_custom_call.1} parent=0
    _
  %s6 = ssub.s32 1, %s4
  %s7 = scalar_select 0, %s6, %s4
  $region1: #{tpu_custom_call.1} parent=0
    #allocation2 [shape = 'u8[16384]{0}', space=vmem, size = 0x4000, scoped, tag = 'input window, operand 0']
    #allocation3 [shape = 's32[2]{0}', space=sflag, size = 0x8, scoped, tag = 'scoped memory for tpu_custom_call.1']
    #allocation4 [shape = 's32[2]{0}', space=sflag, size = 0x8, scoped, tag = 'scoped memory for tpu_custom_call.1']
    #allocation5 [shape = 'u8[65536]{0}', space=vmem, size = 0x10000, scoped, tag = 'input window, operand 1, single buffered']
    #allocation6 [shape = 's32[1]{0}', space=sflag, size = 0x4, scoped, tag = 'scoped memory for tpu_custom_call.1']
    #allocation7 [shape = 'u8[24576]{0}', space=vmem, size = 0x6000, scoped, tag = 'output window, operand 0']
    %8 = vsyncpa [#allocation3], 0
    %s9 = scalar_lea.sflag [#allocation3], 1
    %10 = vsyncpa %s9, 0
    %11 = vsyncpa [#allocation6], 0
    %12 = vsyncpa [#allocation4], 0
    %s13 = scalar_lea.sflag [#allocation4], 1
    %14 = vsyncpa %s13, 0
    loop: start=0, step=1, limit=4
    $region2: #{tpu_custom_call.1} parent=1 // loop_pre_header
      _
    $region3: #{tpu_custom_call.1} parent=1 // loop_header
      %s16 = sphi 0, %s20
      %p17 = scmp.ge.s32.totalorder %s16, 4
      %s23 = sphi 0, %s35
      %s24 = sphi 0, %s31
      %s25 = sphi 0, %s23
      %s26 = sphi 0, %s24
      %s27 = sphi 0, %s25
      %s28 = sphi 0, %s26
      %s38 = sphi 0, %s40
      %s41 = sphi 0, %s38
      %s42 = sphi 0, %s41
      %s58 = sphi 0, %s42
      %s62 = sphi 0, %s62
      %s64 = sphi 0, %s62
      %s65 = sphi 0, %s64
      %s79 = sphi 0, %s65
      %s83 = sphi 0, %s83
      %s85 = sphi 0, %s83
      %s86 = sphi 0, %s85
      %s100 = sphi 0, %s86
      %s108 = sphi 0, %s110
      %s111 = sphi 0, %s108
      %s112 = sphi 0, %s111
      %s128 = sphi 0, %s112
    $region4: #{tpu_custom_call.1} parent=1 // loop_header_branch
      %19 = sbr.rel (%p17) target = $region8
    $region5: #{tpu_custom_call.1} parent=1 // loop_body
      %s21 = ssub.s32 %s16, 1
      %s22 = ssub.s32 %s16, 2
      %s29 = sadd.s32 1, %s24
      %p30 = scmp.ge.s32.totalorder %s29, 1
      %s31 = scalar_select %p30, 0, %s29
      %s32 = sadd.s32 1, %s23
      %s33 = scalar_select %p30, %s32, %s23
      %p34 = scmp.ge.s32.totalorder %s33, 2
      %s35 = scalar_select %p34, 0, %s33
      %s36 = ssub.s32 %s23, %s35
      %p37 = scmp.eq.s32.totalorder %s36, 0
      %s39 = sadd.s32 %s38, 1
      %s40 = scalar_select %p37, %s38, %s39
      %p43 = pneg %p37
      %p44 = scmp.eq.s32.totalorder %s16, 1
      %p45 = por %p43, %p44
      %p46 = scmp.ne.s32.totalorder %s38, %s41
      %p47 = scmp.eq.s32.totalorder %s16, 0
      %p48 = por %p46, %p47
      %p49 = scmp.ne.s32.totalorder %s38, %s41
      %p50 = scmp.eq.s32.totalorder %s21, 1
      %p51 = por %p49, %p50
      %p52 = scmp.ne.s32.totalorder %s41, %s42
      %p53 = scmp.eq.s32.totalorder %s21, 0
      %p54 = por %p52, %p53
      %p55 = scmp.ne.s32.totalorder %s41, %s42
      %p56 = scmp.eq.s32.totalorder %s22, 1
      %p57 = por %p55, %p56
      %p59 = scmp.ne.s32.totalorder %s42, %s58
      %p60 = scmp.eq.s32.totalorder %s22, 0
      %p61 = por %p59, %p60
      %s63 = sadd.s32 %s62, 1
      %p66 = scmp.eq.s32.totalorder %s16, 1
      %p67 = scmp.ne.s32.totalorder %s62, %s64
      %p68 = scmp.eq.s32.totalorder %s16, 0
      %p69 = por %p67, %p68
      %p70 = scmp.ne.s32.totalorder %s62, %s64
      %p71 = scmp.eq.s32.totalorder %s21, 1
      %p72 = por %p70, %p71
      %p73 = scmp.ne.s32.totalorder %s64, %s65
      %p74 = scmp.eq.s32.totalorder %s21, 0
      %p75 = por %p73, %p74
      %p76 = scmp.ne.s32.totalorder %s64, %s65
      %p77 = scmp.eq.s32.totalorder %s22, 1
      %p78 = por %p76, %p77
      %p80 = scmp.ne.s32.totalorder %s65, %s79
      %p81 = scmp.eq.s32.totalorder %s22, 0
      %p82 = por %p80, %p81
      %s84 = sadd.s32 %s83, 1
      %p87 = scmp.eq.s32.totalorder %s16, 1
      %p88 = scmp.ne.s32.totalorder %s83, %s85
      %p89 = scmp.eq.s32.totalorder %s16, 0
      %p90 = por %p88, %p89
      %p91 = scmp.ne.s32.totalorder %s83, %s85
      %p92 = scmp.eq.s32.totalorder %s21, 1
      %p93 = por %p91, %p92
      %p94 = scmp.ne.s32.totalorder %s85, %s86
      %p95 = scmp.eq.s32.totalorder %s21, 0
      %p96 = por %p94, %p95
      %p97 = scmp.ne.s32.totalorder %s85, %s86
      %p98 = scmp.eq.s32.totalorder %s22, 1
      %p99 = por %p97, %p98
      %p101 = scmp.ne.s32.totalorder %s86, %s100
      %p102 = scmp.eq.s32.totalorder %s22, 0
      %p103 = por %p101, %p102
      %s104 = ssub.s32 %s23, %s35
      %s105 = ssub.s32 %s24, %s31
      %s106 = sor.u32 %s104, %s105
      %p107 = scmp.eq.s32.totalorder %s106, 0
      %s109 = sadd.s32 %s108, 1
      %s110 = scalar_select %p107, %s108, %s109
      %p113 = pneg %p107
      %p114 = scmp.eq.s32.totalorder %s16, 1
      %p115 = por %p113, %p114
      %p116 = scmp.ne.s32.totalorder %s108, %s111
      %p117 = scmp.eq.s32.totalorder %s16, 0
      %p118 = por %p116, %p117
      %p119 = scmp.ne.s32.totalorder %s108, %s111
      %p120 = scmp.eq.s32.totalorder %s21, 1
      %p121 = por %p119, %p120
      %p122 = scmp.ne.s32.totalorder %s111, %s112
      %p123 = scmp.eq.s32.totalorder %s21, 0
      %p124 = por %p122, %p123
      %p125 = scmp.ne.s32.totalorder %s111, %s112
      %p126 = scmp.eq.s32.totalorder %s22, 1
      %p127 = por %p125, %p126
      %p129 = scmp.ne.s32.totalorder %s112, %s128
      %p130 = scmp.eq.s32.totalorder %s22, 0
      %p131 = por %p129, %p130
      %p132 = scmp.le.s32.totalorder 1, %s16
      %p133 = scmp.lt.s32.totalorder %s16, 3
      %p134 = pnand %p132, %p133
      %p135 = pneg %p134
      // Predicated region
      $region9: #{tpu_custom_call.1} parent=5 // pred_check
        _
      $region10: #{tpu_custom_call.1} parent=5 // pred_check_branch
        %137 = sbr.rel (%p134) target = $region12
      $region11: #{tpu_custom_call.1} parent=5 // pred_region
        %s138 = ssub.s32 %s16, 1
        // Predicated region
        $region13: #{tpu_custom_call.1} parent=11 // pred_check
          %p139 = pneg %p75
        $region14: #{tpu_custom_call.1} parent=11 // pred_check_branch
          %141 = sbr.rel (%p139) target = $region16
        $region15: #{tpu_custom_call.1} parent=11 // pred_region
          %s143 = ssub.s32 2048, 2048
          %144 = vsyncadd [#allocation6], %s143
          %s145 = sshll.u32 [#allocation5], 4
          %s146 = int_to_ptr.vmem [resolvable:$true] %s145
          %151 = dma.hbm_to_vmem [thread:$0]  %s1, 2048, %s146, [#allocation6], 64, 64, 4
        $region16: #{tpu_custom_call.1} parent=11 // pred_fallthru
          _
        // Predicated region
        $region17: #{tpu_custom_call.1} parent=11 // pred_check
          %p152 = pneg %p96
        $region18: #{tpu_custom_call.1} parent=11 // pred_check_branch
          %154 = sbr.rel (%p152) target = $region20
        $region19: #{tpu_custom_call.1} parent=11 // pred_region
          _
        $region20: #{tpu_custom_call.1} parent=11 // pred_fallthru
          _
      $region12: #{tpu_custom_call.1} parent=5 // pred_fallthru
        _
      %p155 = scmp.lt.s32.totalorder %s16, 2
      // Predicated region
      $region21: #{tpu_custom_call.1} parent=5 // pred_check
        %p156 = pneg %p155
      $region22: #{tpu_custom_call.1} parent=5 // pred_check_branch
        %158 = sbr.rel (%p156) target = $region24
      $region23: #{tpu_custom_call.1} parent=5 // pred_region
        // Predicated region
        $region25: #{tpu_custom_call.1} parent=23 // pred_check
          %p159 = pneg %p48
        $region26: #{tpu_custom_call.1} parent=23 // pred_check_branch
          %161 = sbr.rel (%p159) target = $region28
        $region27: #{tpu_custom_call.1} parent=23 // pred_region
          %s162 = sand.u32 %s38, 1
          %s163 = scalar_lea.sflag [#allocation3], %s162
          %s164 = sand.u32 %s38, 1
          %s165 = smul.addr %s164, 16
          %s166 = scalar_lea.vmem [#allocation2], %s165
          %s168 = ssub.s32 256, 256
          %169 = vsyncadd %s163, %s168
          %s170 = smul.addr %s23, 4
          %s171 = smul.addr %s170, 64
          %s172 = scalar_lea.hbm %s0, %s171
          %s173 = sshll.u32 %s166, 4
          %s174 = int_to_ptr.vmem [resolvable:$true] %s173
          %179 = dma.hbm_to_vmem [thread:$0]  %s172, 256, %s174, %s163, 64, 64, 4
        $region28: #{tpu_custom_call.1} parent=23 // pred_fallthru
          _
      $region24: #{tpu_custom_call.1} parent=5 // pred_fallthru
        _
      %p180 = scmp.le.s32.totalorder 1, %s16
      %p181 = scmp.lt.s32.totalorder %s16, 3
      %p182 = pnand %p180, %p181
      %p183 = pneg %p182
      // Predicated region
      $region29: #{tpu_custom_call.1} parent=5 // pred_check
        _
      $region30: #{tpu_custom_call.1} parent=5 // pred_check_branch
        %185 = sbr.rel (%p182) target = $region32
      $region31: #{tpu_custom_call.1} parent=5 // pred_region
        %s186 = ssub.s32 %s16, 1
        %s187 = sand.u32 %s41, 1
        %s188 = scalar_lea.sflag [#allocation3], %s187
        %s189 = sand.u32 %s41, 1
        %s190 = smul.addr %s189, 16
        %s191 = scalar_lea.vmem [#allocation2], %s190
        // Predicated region
        $region33: #{tpu_custom_call.1} parent=31 // pred_check
          %p192 = pneg %p54
        $region34: #{tpu_custom_call.1} parent=31 // pred_check_branch
          %194 = sbr.rel (%p192) target = $region36
        $region35: #{tpu_custom_call.1} parent=31 // pred_region
          %195 = dma.done %s188, 256
        $region36: #{tpu_custom_call.1} parent=31 // pred_fallthru
          _
        // Predicated region
        $region37: #{tpu_custom_call.1} parent=31 // pred_check
          %p196 = pneg %p75
        $region38: #{tpu_custom_call.1} parent=31 // pred_check_branch
          %198 = sbr.rel (%p196) target = $region40
        $region39: #{tpu_custom_call.1} parent=31 // pred_region
          %199 = dma.done [#allocation6], 2048
        $region40: #{tpu_custom_call.1} parent=31 // pred_fallthru
          _
        %s200 = sand.u32 %s41, 1
        %s201 = scalar_lea.sflag [#allocation3], %s200
        %s202 = sand.u32 %s41, 1
        %s203 = smul.addr %s202, 16
        %s204 = scalar_lea.vmem [#allocation2], %s203
        %p205 = pneg %p54
        %p206 = pneg %p51
        %p207 = pneg %p75
        %p208 = pneg %p72
        %p209 = pneg %p96
        %p210 = pneg %p93
        %p211 = pneg %p124
        %p212 = pneg %p121
        %s213 = sand.u32 %s111, 1
        %s214 = scalar_lea.sflag [#allocation4], %s213
        %s215 = sand.u32 %s111, 1
        %s216 = smul.addr %s215, 24
        %s217 = scalar_lea.vmem [#allocation7], %s216
        %s218 = smul.u32 3, %s26
        %s220 = smul.u32 %s26, 24
        %s221 = sshra.s32 %s220, 3
        %s222 = sand.u32 %s220, 7
        %s223 = smul.addr %s221, 4
        %s224 = scalar_lea.vmem %s191, %s223 [#allocation2]
        %v225 = vld [vmem:[%s224] sm:$0xf]
        %v226 = vld [vmem:[%s224 + $0x4] sm:$0xf]
        %v227 = vld [vmem:[%s224 + $0x8] sm:$0xf]
        %v228 = vld [vmem:[%s224 + $0xc] sm:$0xf]
        %v229 = vld [vmem:[#allocation5] sm:$0xf]
        %v230 = vld [vmem:[#allocation5 + $0x4] sm:$0xf]
        %s231 = scalar_lea.vmem [#allocation5], 16
        %v232 = vld [vmem:[%s231] sm:$0xf]
        %v233 = vld [vmem:[%s231 + $0x4] sm:$0xf]
        %v238 = vunpack.c.l.b16 %v225
        %v239 = vunpack.c.l.b16 %v226
        %v240 = vunpack.c.l.b16 %v227
        %v241 = vunpack.c.l.b16 %v228
        %v242 = vpack.c.b16 %v239, %v238
        %v243 = vpack.c.b16 %v241, %v240
        %vm244 = vsmask.f32 7424
        %v246 = vshrl.u32 %v242, 16
        %v248 = vshll.u32 %v242, 16
        %v250 = vrot.slane %v248, 1
        %v251 = vor.u32 %v246, %v250
        %v253 = vshll.u32 %v243, 16
        %v255 = vrot.slane %v253, 1
        %v256 = vsel %vm244, %v251, %v255
        %v257 = vshrl.u32 %v243, 16
        %v259 = vor.u32 %v257, %v255
        %v262 = vunpack.c.l.b16 %v232
        %v263 = vunpack.c.l.b16 %v233
        %v264 = vpack.c.b16 %v263, %v262
        %vm266 = vcmask 130048
        %v268 = vsel %vm266, %v256, 0
        %v271 = vsel %vm266, %v259, 0
        %273 = vmatprep.subr.bf16.mxu0 0
        %274 = vmatpush1.bf16.msra.mxu0 %v264
        %275 = vmatprep.subr.bf16.mxu0 0
        %276 = vmatpush1.bf16.msra.mxu0 0
        %277 = vmatprep.subr.bf16.mxu0 0
        %278 = vmatpush1.bf16.msra.mxu0 0
        %279 = vmatprep.subr.bf16.mxu0 0
        %280 = vmatpush1.bf16.msra.mxu0 0
        %281 = vmatprep.subr.bf16.mxu0 0
        %282 = vmatpush1.bf16.msra.mxu0 0
        %283 = vmatprep.subr.bf16.mxu0 0
        %284 = vmatpush1.bf16.msra.mxu0 0
        %285 = vmatprep.subr.bf16.mxu0 0
        %286 = vmatpush1.bf16.msra.mxu0 0
        %287 = vmatprep.subr.bf16.mxu0 0
        %288 = vmatpush1.bf16.msra.mxu0 0
        %289 = vmatprep.subr.bf16.mxu0 0
        %290 = vmatpush1.bf16.msra.mxu0 0
        %291 = vmatprep.subr.bf16.mxu0 0
        %292 = vmatpush1.bf16.msra.mxu0 0
        %293 = vmatprep.subr.bf16.mxu0 0
        %294 = vmatpush1.bf16.msra.mxu0 0
        %295 = vmatprep.subr.bf16.mxu0 0
        %296 = vmatpush1.bf16.msra.mxu0 0
        %297 = vmatprep.subr.bf16.mxu0 0
        %298 = vmatpush1.bf16.msra.mxu0 0
        %299 = vmatprep.subr.bf16.mxu0 0
        %300 = vmatpush1.bf16.msra.mxu0 0
        %301 = vmatprep.subr.bf16.mxu0 0
        %302 = vmatpush1.bf16.msra.mxu0 0
        %303 = vmatprep.subr.bf16.mxu0 0
        %304 = vmatpush1.bf16.msra.mxu0 0
        %305 = vmatprep.mubr.bf16.mxu0 0
        %306 = vmatmul.mubr.bf16.gmra.mrb[0].mxu0 %v268
        %v307 = vpop.f32.mrb[0].mxu0
        %v308 = vadd.f32 0.0, %v307
        %v309 = vpop.f32.mrb[0].mxu0
        %v310 = vpop.f32.mrb[0].mxu0
        %v311 = vadd.f32 0.0, %v310
        %v312 = vpop.f32.mrb[0].mxu0
        %313 = vmatprep.mubr.bf16.mxu0 0
        %314 = vmatmul.mubr.bf16.gmra.mrb[0].mxu0 %v271
        %v315 = vpop.f32.mrb[0].mxu0
        %v316 = vadd.f32 0.0, %v315
        %v317 = vpop.f32.mrb[0].mxu0
        %v318 = vpop.f32.mrb[0].mxu0
        %v319 = vpop.f32.mrb[0].mxu0
        %320 = vdwg.mxu0
        %v321 = vpack.c.b16 %v240, %v240
        %v324 = vunpack.c.l.b16 %v229
        %v325 = vunpack.c.l.b16 %v230
        %v326 = vpack.c.b16 %v325, %v324
        %v328 = vsel %vm266, %v242, 0
        %v331 = vsel %vm266, %v321, 0
        %333 = vmatprep.subr.bf16.mxu0 0
        %334 = vmatpush1.bf16.msra.mxu0 %v326
        %335 = vmatprep.subr.bf16.mxu0 0
        %336 = vmatpush1.bf16.msra.mxu0 0
        %337 = vmatprep.subr.bf16.mxu0 0
        %338 = vmatpush1.bf16.msra.mxu0 0
        %339 = vmatprep.subr.bf16.mxu0 0
        %340 = vmatpush1.bf16.msra.mxu0 0
        %341 = vmatprep.subr.bf16.mxu0 0
        %342 = vmatpush1.bf16.msra.mxu0 0
        %343 = vmatprep.subr.bf16.mxu0 0
        %344 = vmatpush1.bf16.msra.mxu0 0
        %345 = vmatprep.subr.bf16.mxu0 0
        %346 = vmatpush1.bf16.msra.mxu0 0
        %347 = vmatprep.subr.bf16.mxu0 0
        %348 = vmatpush1.bf16.msra.mxu0 0
        %349 = vmatprep.subr.bf16.mxu0 0
        %350 = vmatpush1.bf16.msra.mxu0 0
        %351 = vmatprep.subr.bf16.mxu0 0
        %352 = vmatpush1.bf16.msra.mxu0 0
        %353 = vmatprep.subr.bf16.mxu0 0
        %354 = vmatpush1.bf16.msra.mxu0 0
        %355 = vmatprep.subr.bf16.mxu0 0
        %356 = vmatpush1.bf16.msra.mxu0 0
        %357 = vmatprep.subr.bf16.mxu0 0
        %358 = vmatpush1.bf16.msra.mxu0 0
        %359 = vmatprep.subr.bf16.mxu0 0
        %360 = vmatpush1.bf16.msra.mxu0 0
        %361 = vmatprep.subr.bf16.mxu0 0
        %362 = vmatpush1.bf16.msra.mxu0 0
        %363 = vmatprep.subr.bf16.mxu0 0
        %364 = vmatpush1.bf16.msra.mxu0 0
        %365 = vmatprep.mubr.bf16.mxu0 0
        %366 = vmatmul.mubr.bf16.gmra.mrb[0].mxu0 %v328
        %v367 = vpop.f32.mrb[0].mxu0
        %v368 = vadd.f32 %v308, %v367
        %v369 = vpop.f32.mrb[0].mxu0
        %v370 = vpop.f32.mrb[0].mxu0
        %v371 = vadd.f32 %v311, %v370
        %v372 = vpop.f32.mrb[0].mxu0
        %373 = vmatprep.mubr.bf16.mxu0 0
        %374 = vmatmul.mubr.bf16.gmra.mrb[0].mxu0 %v331
        %v375 = vpop.f32.mrb[0].mxu0
        %v376 = vadd.f32 %v316, %v375
        %v377 = vpop.f32.mrb[0].mxu0
        %v378 = vpop.f32.mrb[0].mxu0
        %v379 = vpop.f32.mrb[0].mxu0
        %380 = vdwg.mxu0
        %s381 = scalar_lea.vmem [#allocation5], 32
        %v382 = vld [vmem:[%s381] sm:$0xf]
        %v383 = vld [vmem:[%s381 + $0x4] sm:$0xf]
        %vm384 = vcmask 1046528
        %v385 = vrot.slane %v242, 1
        %v386 = vrot.slane %v243, 1
        %v387 = vsel %vm384, %v385, %v386
        %v390 = vunpack.c.l.b16 %v382
        %v391 = vunpack.c.l.b16 %v383
        %v392 = vpack.c.b16 %v391, %v390
        %v395 = vsel %vm266, %v387, 0
        %v398 = vsel %vm266, %v386, 0
        %400 = vmatprep.subr.bf16.mxu0 0
        %401 = vmatpush1.bf16.msra.mxu0 %v392
        %402 = vmatprep.subr.bf16.mxu0 0
        %403 = vmatpush1.bf16.msra.mxu0 0
        %404 = vmatprep.subr.bf16.mxu0 0
        %405 = vmatpush1.bf16.msra.mxu0 0
        %406 = vmatprep.subr.bf16.mxu0 0
        %407 = vmatpush1.bf16.msra.mxu0 0
        %408 = vmatprep.subr.bf16.mxu0 0
        %409 = vmatpush1.bf16.msra.mxu0 0
        %410 = vmatprep.subr.bf16.mxu0 0
        %411 = vmatpush1.bf16.msra.mxu0 0
        %412 = vmatprep.subr.bf16.mxu0 0
        %413 = vmatpush1.bf16.msra.mxu0 0
        %414 = vmatprep.subr.bf16.mxu0 0
        %415 = vmatpush1.bf16.msra.mxu0 0
        %416 = vmatprep.subr.bf16.mxu0 0
        %417 = vmatpush1.bf16.msra.mxu0 0
        %418 = vmatprep.subr.bf16.mxu0 0
        %419 = vmatpush1.bf16.msra.mxu0 0
        %420 = vmatprep.subr.bf16.mxu0 0
        %421 = vmatpush1.bf16.msra.mxu0 0
        %422 = vmatprep.subr.bf16.mxu0 0
        %423 = vmatpush1.bf16.msra.mxu0 0
        %424 = vmatprep.subr.bf16.mxu0 0
        %425 = vmatpush1.bf16.msra.mxu0 0
        %426 = vmatprep.subr.bf16.mxu0 0
        %427 = vmatpush1.bf16.msra.mxu0 0
        %428 = vmatprep.subr.bf16.mxu0 0
        %429 = vmatpush1.bf16.msra.mxu0 0
        %430 = vmatprep.subr.bf16.mxu0 0
        %431 = vmatpush1.bf16.msra.mxu0 0
        %432 = vmatprep.mubr.bf16.mxu0 0
        %433 = vmatmul.mubr.bf16.gmra.mrb[0].mxu0 %v395
        %v434 = vpop.f32.mrb[0].mxu0
        %v435 = vadd.f32 0.0, %v434
        %v436 = vpop.f32.mrb[0].mxu0
        %v437 = vpop.f32.mrb[0].mxu0
        %v438 = vadd.f32 0.0, %v437
        %v439 = vpop.f32.mrb[0].mxu0
        %440 = vmatprep.mubr.bf16.mxu0 0
        %441 = vmatmul.mubr.bf16.gmra.mrb[0].mxu0 %v398
        %v442 = vpop.f32.mrb[0].mxu0
        %v443 = vadd.f32 0.0, %v442
        %v444 = vpop.f32.mrb[0].mxu0
        %v445 = vpop.f32.mrb[0].mxu0
        %v446 = vpop.f32.mrb[0].mxu0
        %447 = vdwg.mxu0
        %v448 = vadd.f32 %v368, %v435
        %v449 = vadd.f32 %v371, %v438
        %v450 = vadd.f32 %v376, %v443
        %s451 = scalar_lea.vmem [#allocation5], 48
        %v452 = vld [vmem:[%s451] sm:$0xf]
        %v453 = vld [vmem:[%s451 + $0x4] sm:$0xf]
        %vm454 = vsmask.f32 6400
        %v455 = vrot.slane %v246, 1
        %v456 = vrot.slane %v248, 2
        %v457 = vor.u32 %v455, %v456
        %v458 = vrot.slane %v257, 1
        %v459 = vrot.slane %v253, 2
        %v460 = vor.u32 %v458, %v459
        %v461 = vsel %vm454, %v457, %v460
        %v464 = vunpack.c.l.b16 %v452
        %v465 = vunpack.c.l.b16 %v453
        %v466 = vpack.c.b16 %v465, %v464
        %v469 = vsel %vm266, %v461, 0
        %v472 = vsel %vm266, %v460, 0
        %474 = vmatprep.subr.bf16.mxu0 0
        %475 = vmatpush1.bf16.msra.mxu0 %v466
        %476 = vmatprep.subr.bf16.mxu0 0
        %477 = vmatpush1.bf16.msra.mxu0 0
        %478 = vmatprep.subr.bf16.mxu0 0
        %479 = vmatpush1.bf16.msra.mxu0 0
        %480 = vmatprep.subr.bf16.mxu0 0
        %481 = vmatpush1.bf16.msra.mxu0 0
        %482 = vmatprep.subr.bf16.mxu0 0
        %483 = vmatpush1.bf16.msra.mxu0 0
        %484 = vmatprep.subr.bf16.mxu0 0
        %485 = vmatpush1.bf16.msra.mxu0 0
        %486 = vmatprep.subr.bf16.mxu0 0
        %487 = vmatpush1.bf16.msra.mxu0 0
        %488 = vmatprep.subr.bf16.mxu0 0
        %489 = vmatpush1.bf16.msra.mxu0 0
        %490 = vmatprep.subr.bf16.mxu0 0
        %491 = vmatpush1.bf16.msra.mxu0 0
        %492 = vmatprep.subr.bf16.mxu0 0
        %493 = vmatpush1.bf16.msra.mxu0 0
        %494 = vmatprep.subr.bf16.mxu0 0
        %495 = vmatpush1.bf16.msra.mxu0 0
        %496 = vmatprep.subr.bf16.mxu0 0
        %497 = vmatpush1.bf16.msra.mxu0 0
        %498 = vmatprep.subr.bf16.mxu0 0
        %499 = vmatpush1.bf16.msra.mxu0 0
        %500 = vmatprep.subr.bf16.mxu0 0
        %501 = vmatpush1.bf16.msra.mxu0 0
        %502 = vmatprep.subr.bf16.mxu0 0
        %503 = vmatpush1.bf16.msra.mxu0 0
        %504 = vmatprep.subr.bf16.mxu0 0
        %505 = vmatpush1.bf16.msra.mxu0 0
        %506 = vmatprep.mubr.bf16.mxu0 0
        %507 = vmatmul.mubr.bf16.gmra.mrb[0].mxu0 %v469
        %v508 = vpop.f32.mrb[0].mxu0
        %v509 = vadd.f32 0.0, %v508
        %v510 = vpop.f32.mrb[0].mxu0
        %v511 = vpop.f32.mrb[0].mxu0
        %v512 = vadd.f32 0.0, %v511
        %v513 = vpop.f32.mrb[0].mxu0
        %514 = vmatprep.mubr.bf16.mxu0 0
        %515 = vmatmul.mubr.bf16.gmra.mrb[0].mxu0 %v472
        %v516 = vpop.f32.mrb[0].mxu0
        %v517 = vadd.f32 0.0, %v516
        %v518 = vpop.f32.mrb[0].mxu0
        %v519 = vpop.f32.mrb[0].mxu0
        %v520 = vpop.f32.mrb[0].mxu0
        %521 = vdwg.mxu0
        %v522 = vadd.f32 %v448, %v509
        %v523 = vadd.f32 %v449, %v512
        %v524 = vadd.f32 %v450, %v517
        %s525 = scalar_lea.vmem [#allocation5], 64
        %v526 = vld [vmem:[%s525] sm:$0xf]
        %v527 = vld [vmem:[%s525 + $0x4] sm:$0xf]
        %vm528 = vcmask 1045504
        %v529 = vrot.slane %v242, 2
        %v530 = vrot.slane %v243, 2
        %v531 = vsel %vm528, %v529, %v530
        %v534 = vunpack.c.l.b16 %v526
        %v535 = vunpack.c.l.b16 %v527
        %v536 = vpack.c.b16 %v535, %v534
        %v539 = vsel %vm266, %v531, 0
        %v542 = vsel %vm266, %v530, 0
        %544 = vmatprep.subr.bf16.mxu0 0
        %545 = vmatpush1.bf16.msra.mxu0 %v536
        %546 = vmatprep.subr.bf16.mxu0 0
        %547 = vmatpush1.bf16.msra.mxu0 0
        %548 = vmatprep.subr.bf16.mxu0 0
        %549 = vmatpush1.bf16.msra.mxu0 0
        %550 = vmatprep.subr.bf16.mxu0 0
        %551 = vmatpush1.bf16.msra.mxu0 0
        %552 = vmatprep.subr.bf16.mxu0 0
        %553 = vmatpush1.bf16.msra.mxu0 0
        %554 = vmatprep.subr.bf16.mxu0 0
        %555 = vmatpush1.bf16.msra.mxu0 0
        %556 = vmatprep.subr.bf16.mxu0 0
        %557 = vmatpush1.bf16.msra.mxu0 0
        %558 = vmatprep.subr.bf16.mxu0 0
        %559 = vmatpush1.bf16.msra.mxu0 0
        %560 = vmatprep.subr.bf16.mxu0 0
        %561 = vmatpush1.bf16.msra.mxu0 0
        %562 = vmatprep.subr.bf16.mxu0 0
        %563 = vmatpush1.bf16.msra.mxu0 0
        %564 = vmatprep.subr.bf16.mxu0 0
        %565 = vmatpush1.bf16.msra.mxu0 0
        %566 = vmatprep.subr.bf16.mxu0 0
        %567 = vmatpush1.bf16.msra.mxu0 0
        %568 = vmatprep.subr.bf16.mxu0 0
        %569 = vmatpush1.bf16.msra.mxu0 0
        %570 = vmatprep.subr.bf16.mxu0 0
        %571 = vmatpush1.bf16.msra.mxu0 0
        %572 = vmatprep.subr.bf16.mxu0 0
        %573 = vmatpush1.bf16.msra.mxu0 0
        %574 = vmatprep.subr.bf16.mxu0 0
        %575 = vmatpush1.bf16.msra.mxu0 0
        %576 = vmatprep.mubr.bf16.mxu0 0
        %577 = vmatmul.mubr.bf16.gmra.mrb[0].mxu0 %v539
        %v578 = vpop.f32.mrb[0].mxu0
        %v579 = vadd.f32 0.0, %v578
        %v580 = vpop.f32.mrb[0].mxu0
        %v581 = vpop.f32.mrb[0].mxu0
        %v582 = vadd.f32 0.0, %v581
        %v583 = vpop.f32.mrb[0].mxu0
        %584 = vmatprep.mubr.bf16.mxu0 0
        %585 = vmatmul.mubr.bf16.gmra.mrb[0].mxu0 %v542
        %v586 = vpop.f32.mrb[0].mxu0
        %v587 = vadd.f32 0.0, %v586
        %v588 = vpop.f32.mrb[0].mxu0
        %v589 = vpop.f32.mrb[0].mxu0
        %v590 = vpop.f32.mrb[0].mxu0
        %591 = vdwg.mxu0
        %v592 = vadd.f32 %v522, %v579
        %v593 = vadd.f32 %v523, %v582
        %v594 = vadd.f32 %v524, %v587
        %s595 = scalar_lea.vmem [#allocation5], 80
        %v596 = vld [vmem:[%s595] sm:$0xf]
        %v597 = vld [vmem:[%s595 + $0x4] sm:$0xf]
        %vm598 = vsmask.f32 5376
        %v599 = vrot.slane %v246, 2
        %v600 = vrot.slane %v248, 3
        %v601 = vor.u32 %v599, %v600
        %v602 = vrot.slane %v257, 2
        %v603 = vrot.slane %v253, 3
        %v604 = vor.u32 %v602, %v603
        %v605 = vsel %vm598, %v601, %v604
        %v608 = vunpack.c.l.b16 %v596
        %v609 = vunpack.c.l.b16 %v597
        %v610 = vpack.c.b16 %v609, %v608
        %v613 = vsel %vm266, %v605, 0
        %v616 = vsel %vm266, %v604, 0
        %618 = vmatprep.subr.bf16.mxu0 0
        %619 = vmatpush1.bf16.msra.mxu0 %v610
        %620 = vmatprep.subr.bf16.mxu0 0
        %621 = vmatpush1.bf16.msra.mxu0 0
        %622 = vmatprep.subr.bf16.mxu0 0
        %623 = vmatpush1.bf16.msra.mxu0 0
        %624 = vmatprep.subr.bf16.mxu0 0
        %625 = vmatpush1.bf16.msra.mxu0 0
        %626 = vmatprep.subr.bf16.mxu0 0
        %627 = vmatpush1.bf16.msra.mxu0 0
        %628 = vmatprep.subr.bf16.mxu0 0
        %629 = vmatpush1.bf16.msra.mxu0 0
        %630 = vmatprep.subr.bf16.mxu0 0
        %631 = vmatpush1.bf16.msra.mxu0 0
        %632 = vmatprep.subr.bf16.mxu0 0
        %633 = vmatpush1.bf16.msra.mxu0 0
        %634 = vmatprep.subr.bf16.mxu0 0
        %635 = vmatpush1.bf16.msra.mxu0 0
        %636 = vmatprep.subr.bf16.mxu0 0
        %637 = vmatpush1.bf16.msra.mxu0 0
        %638 = vmatprep.subr.bf16.mxu0 0
        %639 = vmatpush1.bf16.msra.mxu0 0
        %640 = vmatprep.subr.bf16.mxu0 0
        %641 = vmatpush1.bf16.msra.mxu0 0
        %642 = vmatprep.subr.bf16.mxu0 0
        %643 = vmatpush1.bf16.msra.mxu0 0
        %644 = vmatprep.subr.bf16.mxu0 0
        %645 = vmatpush1.bf16.msra.mxu0 0
        %646 = vmatprep.subr.bf16.mxu0 0
        %647 = vmatpush1.bf16.msra.mxu0 0
        %648 = vmatprep.subr.bf16.mxu0 0
        %649 = vmatpush1.bf16.msra.mxu0 0
        %650 = vmatprep.mubr.bf16.mxu0 0
        %651 = vmatmul.mubr.bf16.gmra.mrb[0].mxu0 %v613
        %v652 = vpop.f32.mrb[0].mxu0
        %v653 = vadd.f32 0.0, %v652
        %v654 = vpop.f32.mrb[0].mxu0
        %v655 = vpop.f32.mrb[0].mxu0
        %v656 = vadd.f32 0.0, %v655
        %v657 = vpop.f32.mrb[0].mxu0
        %658 = vmatprep.mubr.bf16.mxu0 0
        %659 = vmatmul.mubr.bf16.gmra.mrb[0].mxu0 %v616
        %v660 = vpop.f32.mrb[0].mxu0
        %v661 = vadd.f32 0.0, %v660
        %v662 = vpop.f32.mrb[0].mxu0
        %v663 = vpop.f32.mrb[0].mxu0
        %v664 = vpop.f32.mrb[0].mxu0
        %665 = vdwg.mxu0
        %v666 = vadd.f32 %v592, %v653
        %v667 = vadd.f32 %v593, %v656
        %v668 = vadd.f32 %v594, %v661
        %s669 = scalar_lea.vmem [#allocation5], 96
        %v670 = vld [vmem:[%s669] sm:$0xf]
        %v671 = vld [vmem:[%s669 + $0x4] sm:$0xf]
        %vm672 = vcmask 1044480
        %v673 = vrot.slane %v242, 3
        %v674 = vrot.slane %v243, 3
        %v675 = vsel %vm672, %v673, %v674
        %v678 = vunpack.c.l.b16 %v670
        %v679 = vunpack.c.l.b16 %v671
        %v680 = vpack.c.b16 %v679, %v678
        %v683 = vsel %vm266, %v675, 0
        %v686 = vsel %vm266, %v674, 0
        %688 = vmatprep.subr.bf16.mxu0 0
        %689 = vmatpush1.bf16.msra.mxu0 %v680
        %690 = vmatprep.subr.bf16.mxu0 0
        %691 = vmatpush1.bf16.msra.mxu0 0
        %692 = vmatprep.subr.bf16.mxu0 0
        %693 = vmatpush1.bf16.msra.mxu0 0
        %694 = vmatprep.subr.bf16.mxu0 0
        %695 = vmatpush1.bf16.msra.mxu0 0
        %696 = vmatprep.subr.bf16.mxu0 0
        %697 = vmatpush1.bf16.msra.mxu0 0
        %698 = vmatprep.subr.bf16.mxu0 0
        %699 = vmatpush1.bf16.msra.mxu0 0
        %700 = vmatprep.subr.bf16.mxu0 0
        %701 = vmatpush1.bf16.msra.mxu0 0
        %702 = vmatprep.subr.bf16.mxu0 0
        %703 = vmatpush1.bf16.msra.mxu0 0
        %704 = vmatprep.subr.bf16.mxu0 0
        %705 = vmatpush1.bf16.msra.mxu0 0
        %706 = vmatprep.subr.bf16.mxu0 0
        %707 = vmatpush1.bf16.msra.mxu0 0
        %708 = vmatprep.subr.bf16.mxu0 0
        %709 = vmatpush1.bf16.msra.mxu0 0
        %710 = vmatprep.subr.bf16.mxu0 0
        %711 = vmatpush1.bf16.msra.mxu0 0
        %712 = vmatprep.subr.bf16.mxu0 0
        %713 = vmatpush1.bf16.msra.mxu0 0
        %714 = vmatprep.subr.bf16.mxu0 0
        %715 = vmatpush1.bf16.msra.mxu0 0
        %716 = vmatprep.subr.bf16.mxu0 0
        %717 = vmatpush1.bf16.msra.mxu0 0
        %718 = vmatprep.subr.bf16.mxu0 0
        %719 = vmatpush1.bf16.msra.mxu0 0
        %720 = vmatprep.mubr.bf16.mxu0 0
        %721 = vmatmul.mubr.bf16.gmra.mrb[0].mxu0 %v683
        %v722 = vpop.f32.mrb[0].mxu0
        %v723 = vadd.f32 0.0, %v722
        %v724 = vpop.f32.mrb[0].mxu0
        %v725 = vpop.f32.mrb[0].mxu0
        %v726 = vadd.f32 0.0, %v725
        %v727 = vpop.f32.mrb[0].mxu0
        %728 = vmatprep.mubr.bf16.mxu0 0
        %729 = vmatmul.mubr.bf16.gmra.mrb[0].mxu0 %v686
        %v730 = vpop.f32.mrb[0].mxu0
        %v731 = vadd.f32 0.0, %v730
        %v732 = vpop.f32.mrb[0].mxu0
        %v733 = vpop.f32.mrb[0].mxu0
        %v734 = vpop.f32.mrb[0].mxu0
        %735 = vdwg.mxu0
        %v736 = vadd.f32 %v666, %v723
        %v737 = vadd.f32 %v667, %v726
        %v738 = vadd.f32 %v668, %v731
        %s739 = scalar_lea.vmem [#allocation5], 112
        %v740 = vld [vmem:[%s739] sm:$0xf]
        %v741 = vld [vmem:[%s739 + $0x4] sm:$0xf]
        %vm742 = vsmask.f32 4352
        %v743 = vrot.slane %v246, 3
        %v744 = vrot.slane %v248, 4
        %v745 = vor.u32 %v743, %v744
        %v746 = vrot.slane %v257, 3
        %v747 = vrot.slane %v253, 4
        %v748 = vor.u32 %v746, %v747
        %v749 = vsel %vm742, %v745, %v748
        %v752 = vunpack.c.l.b16 %v740
        %v753 = vunpack.c.l.b16 %v741
        %v754 = vpack.c.b16 %v753, %v752
        %v757 = vsel %vm266, %v749, 0
        %v760 = vsel %vm266, %v748, 0
        %762 = vmatprep.subr.bf16.mxu0 0
        %763 = vmatpush1.bf16.msra.mxu0 %v754
        %764 = vmatprep.subr.bf16.mxu0 0
        %765 = vmatpush1.bf16.msra.mxu0 0
        %766 = vmatprep.subr.bf16.mxu0 0
        %767 = vmatpush1.bf16.msra.mxu0 0
        %768 = vmatprep.subr.bf16.mxu0 0
        %769 = vmatpush1.bf16.msra.mxu0 0
        %770 = vmatprep.subr.bf16.mxu0 0
        %771 = vmatpush1.bf16.msra.mxu0 0
        %772 = vmatprep.subr.bf16.mxu0 0
        %773 = vmatpush1.bf16.msra.mxu0 0
        %774 = vmatprep.subr.bf16.mxu0 0
        %775 = vmatpush1.bf16.msra.mxu0 0
        %776 = vmatprep.subr.bf16.mxu0 0
        %777 = vmatpush1.bf16.msra.mxu0 0
        %778 = vmatprep.subr.bf16.mxu0 0
        %779 = vmatpush1.bf16.msra.mxu0 0
        %780 = vmatprep.subr.bf16.mxu0 0
        %781 = vmatpush1.bf16.msra.mxu0 0
        %782 = vmatprep.subr.bf16.mxu0 0
        %783 = vmatpush1.bf16.msra.mxu0 0
        %784 = vmatprep.subr.bf16.mxu0 0
        %785 = vmatpush1.bf16.msra.mxu0 0
        %786 = vmatprep.subr.bf16.mxu0 0
        %787 = vmatpush1.bf16.msra.mxu0 0
        %788 = vmatprep.subr.bf16.mxu0 0
        %789 = vmatpush1.bf16.msra.mxu0 0
        %790 = vmatprep.subr.bf16.mxu0 0
        %791 = vmatpush1.bf16.msra.mxu0 0
        %792 = vmatprep.subr.bf16.mxu0 0
        %793 = vmatpush1.bf16.msra.mxu0 0
        %794 = vmatprep.mubr.bf16.mxu0 0
        %795 = vmatmul.mubr.bf16.gmra.mrb[0].mxu0 %v757
        %v796 = vpop.f32.mrb[0].mxu0
        %v797 = vadd.f32 0.0, %v796
        %v798 = vpop.f32.mrb[0].mxu0
        %v799 = vpop.f32.mrb[0].mxu0
        %v800 = vadd.f32 0.0, %v799
        %v801 = vpop.f32.mrb[0].mxu0
        %802 = vmatprep.mubr.bf16.mxu0 0
        %803 = vmatmul.mubr.bf16.gmra.mrb[0].mxu0 %v760
        %v804 = vpop.f32.mrb[0].mxu0
        %v805 = vadd.f32 0.0, %v804
        %v806 = vpop.f32.mrb[0].mxu0
        %v807 = vpop.f32.mrb[0].mxu0
        %v808 = vpop.f32.mrb[0].mxu0
        %809 = vdwg.mxu0
        %v810 = vadd.f32 %v736, %v797
        %v811 = vadd.f32 %v737, %v800
        %v812 = vadd.f32 %v738, %v805
        %v813 = vld [vmem:[%s2] sm:$0x1]
        %v815 = vlaneseq
        %v816 = vshrl.u32 %v815, 7
        %v817 = vsub.s32 0, %v816
        %v818 = vrot.slane %v813, %v817
        %v820 = vadd.f32 %v810, %v818
        %v821 = vadd.f32 %v811, %v818
        %v822 = vadd.f32 %v812, %v818
        %v823 = vmul.f32 %v820, 0.5
        %v824 = vmul.f32 %v821, 0.5
        %v825 = vmul.f32 %v822, 0.5
        %v826 = vmul.f32 %v820, 0.70710677
        %v827 = vmul.f32 %v821, 0.70710677
        %v828 = vmul.f32 %v822, 0.70710677
        %vm829 = vcmp.lt.f32.partialorder %v826, 0.0
        %vm830 = vcmp.lt.f32.partialorder %v827, 0.0
        %vm831 = vcmp.lt.f32.partialorder %v828, 0.0
        %v832 = vsel %vm829, -1.0, 1.0
        %v833 = vsel %vm830, -1.0, 1.0
        %v834 = vsel %vm831, -1.0, 1.0
        %v835 = vand.u32 2147483647, %v826
        %v836 = vand.u32 2147483647, %v827
        %v837 = vand.u32 2147483647, %v828
        %v838 = vmul.f32 %v835, 0.3275911
        %v839 = vmul.f32 %v836, 0.3275911
        %v840 = vmul.f32 %v837, 0.3275911
        %v841 = vadd.f32 %v838, 1.0
        %v842 = vadd.f32 %v839, 1.0
        %v843 = vadd.f32 %v840, 1.0
        %v844 = vrcp.pop %v841
        %v845 = vmul.f32 1.0, %v844
        %v846 = vrcp.pop %v842
        %v847 = vmul.f32 1.0, %v846
        %v848 = vrcp.pop %v843
        %v849 = vmul.f32 1.0, %v848
        %v850 = vmul.f32 %v845, 1.0614054
        %v851 = vmul.f32 %v847, 1.0614054
        %v852 = vmul.f32 %v849, 1.0614054
        %v853 = vadd.f32 %v850, -1.4531521
        %v854 = vadd.f32 %v851, -1.4531521
        %v855 = vadd.f32 %v852, -1.4531521
        %v856 = vmul.f32 %v853, %v845
        %v857 = vmul.f32 %v854, %v847
        %v858 = vmul.f32 %v855, %v849
        %v859 = vadd.f32 %v856, 1.4214138
        %v860 = vadd.f32 %v857, 1.4214138
        %v861 = vadd.f32 %v858, 1.4214138
        %v862 = vmul.f32 %v859, %v845
        %v863 = vmul.f32 %v860, %v847
        %v864 = vmul.f32 %v861, %v849
        %v865 = vadd.f32 %v862, -0.28449672
        %v866 = vadd.f32 %v863, -0.28449672
        %v867 = vadd.f32 %v864, -0.28449672
        %v868 = vmul.f32 %v865, %v845
        %v869 = vmul.f32 %v866, %v847
        %v870 = vmul.f32 %v867, %v849
        %v871 = vadd.f32 %v868, 0.2548296
        %v872 = vadd.f32 %v869, 0.2548296
        %v873 = vadd.f32 %v870, 0.2548296
        %v874 = vmul.f32 %v871, %v845
        %v875 = vmul.f32 %v872, %v847
        %v876 = vmul.f32 %v873, %v849
        %v877 = vsub.f32 0.0, %v835
        %v878 = vsub.f32 0.0, %v836
        %v879 = vsub.f32 0.0, %v837
        %v880 = vmul.f32 %v877, %v835
        %v881 = vmul.f32 %v878, %v836
        %v882 = vmul.f32 %v879, %v837
        %v883 = vmul.f32 %v880, 1.442695
        %v884 = vpow.pop %v883
        %v885 = vmul.f32 %v881, 1.442695
        %v886 = vpow.pop %v885
        %v887 = vmul.f32 %v882, 1.442695
        %v888 = vpow.pop %v887
        %v889 = vmul.f32 %v874, %v884
        %v890 = vmul.f32 %v875, %v886
        %v891 = vmul.f32 %v876, %v888
        %v892 = vsub.f32 1.0, %v889
        %v893 = vsub.f32 1.0, %v890
        %v894 = vsub.f32 1.0, %v891
        %v895 = vmul.f32 %v832, %v892
        %v896 = vmul.f32 %v833, %v893
        %v897 = vmul.f32 %v834, %v894
        %v898 = vadd.f32 %v895, 1.0
        %v899 = vadd.f32 %v896, 1.0
        %v900 = vadd.f32 %v897, 1.0
        %v901 = vmul.f32 %v823, %v898
        %v902 = vmul.f32 %v824, %v899
        %v903 = vmul.f32 %v825, %v900
        %904 = vst.msk [vmem:[%s217] sm:$0xff] %vm266, %v901
        %905 = vst.msk [vmem:[%s217 + $0x8] sm:$0xff] %vm266, %v902
        %906 = vst.msk [vmem:[%s217 + $0x10] sm:$0xff] %vm266, %v903
        %v907 = vld [vmem:[%s224] sm:$0xf]
        %v908 = vld [vmem:[%s224 + $0x4] sm:$0xf]
        %v909 = vld [vmem:[%s224 + $0x8] sm:$0xf]
        %v910 = vld [vmem:[%s224 + $0xc] sm:$0xf]
        %s911 = scalar_lea.vmem [#allocation5], 8
        %v912 = vld [vmem:[%s911] sm:$0xf]
        %v913 = vld [vmem:[%s911 + $0x4] sm:$0xf]
        %s914 = scalar_lea.vmem [#allocation5], 24
        %v915 = vld [vmem:[%s914] sm:$0xf]
        %v916 = vld [vmem:[%s914 + $0x4] sm:$0xf]
        %v921 = vunpack.c.l.b16 %v907
        %v922 = vunpack.c.l.b16 %v908
        %v923 = vunpack.c.l.b16 %v909
        %v924 = vunpack.c.l.b16 %v910
        %v925 = vpack.c.b16 %v922, %v921
        %v926 = vpack.c.b16 %v924, %v923
        %v928 = vshrl.u32 %v925, 16
        %v930 = vshll.u32 %v925, 16
        %v932 = vrot.slane %v930, 1
        %v933 = vor.u32 %v928, %v932
        %v935 = vshll.u32 %v926, 16
        %v937 = vrot.slane %v935, 1
        %v938 = vsel %vm244, %v933, %v937
        %v939 = vshrl.u32 %v926, 16
        %v941 = vor.u32 %v939, %v937
        %942 = vrot.lane.b32.xlu0 %v938, 112
        %v943 = vpop.permute.xlu0 %942
        %944 = vrot.lane.b32.xlu0 %v941, 112
        %v945 = vpop.permute.xlu0 %944
        %v948 = vunpack.c.l.b16 %v915
        %v949 = vunpack.c.l.b16 %v916
        %v950 = vpack.c.b16 %v949, %v948
        %v953 = vsel %vm266, %v943, 0
        %v956 = vsel %vm266, %v945, 0
        %958 = vmatprep.subr.bf16.mxu0 0
        %959 = vmatpush1.bf16.msra.mxu0 %v950
        %960 = vmatprep.subr.bf16.mxu0 0
        %961 = vmatpush1.bf16.msra.mxu0 0
        %962 = vmatprep.subr.bf16.mxu0 0
        %963 = vmatpush1.bf16.msra.mxu0 0
        %964 = vmatprep.subr.bf16.mxu0 0
        %965 = vmatpush1.bf16.msra.mxu0 0
        %966 = vmatprep.subr.bf16.mxu0 0
        %967 = vmatpush1.bf16.msra.mxu0 0
        %968 = vmatprep.subr.bf16.mxu0 0
        %969 = vmatpush1.bf16.msra.mxu0 0
        %970 = vmatprep.subr.bf16.mxu0 0
        %971 = vmatpush1.bf16.msra.mxu0 0
        %972 = vmatprep.subr.bf16.mxu0 0
        %973 = vmatpush1.bf16.msra.mxu0 0
        %974 = vmatprep.subr.bf16.mxu0 0
        %975 = vmatpush1.bf16.msra.mxu0 0
        %976 = vmatprep.subr.bf16.mxu0 0
        %977 = vmatpush1.bf16.msra.mxu0 0
        %978 = vmatprep.subr.bf16.mxu0 0
        %979 = vmatpush1.bf16.msra.mxu0 0
        %980 = vmatprep.subr.bf16.mxu0 0
        %981 = vmatpush1.bf16.msra.mxu0 0
        %982 = vmatprep.subr.bf16.mxu0 0
        %983 = vmatpush1.bf16.msra.mxu0 0
        %984 = vmatprep.subr.bf16.mxu0 0
        %985 = vmatpush1.bf16.msra.mxu0 0
        %986 = vmatprep.subr.bf16.mxu0 0
        %987 = vmatpush1.bf16.msra.mxu0 0
        %988 = vmatprep.subr.bf16.mxu0 0
        %989 = vmatpush1.bf16.msra.mxu0 0
        %990 = vmatprep.mubr.bf16.mxu0 0
        %991 = vmatmul.mubr.bf16.gmra.mrb[0].mxu0 %v953
        %v992 = vpop.f32.mrb[0].mxu0
        %v993 = vadd.f32 0.0, %v992
        %v994 = vpop.f32.mrb[0].mxu0
        %v995 = vpop.f32.mrb[0].mxu0
        %v996 = vadd.f32 0.0, %v995
        %v997 = vpop.f32.mrb[0].mxu0
        %998 = vmatprep.mubr.bf16.mxu0 0
        %999 = vmatmul.mubr.bf16.gmra.mrb[0].mxu0 %v956
        %v1000 = vpop.f32.mrb[0].mxu0
        %v1001 = vadd.f32 0.0, %v1000
        %v1002 = vpop.f32.mrb[0].mxu0
        %v1003 = vpop.f32.mrb[0].mxu0
        %v1004 = vpop.f32.mrb[0].mxu0
        %1005 = vdwg.mxu0
        %v1006 = vpack.c.b16 %v923, %v923
        %1007 = vrot.lane.b32.xlu0 %v925, 112
        %v1008 = vpop.permute.xlu0 %1007
        %1009 = vrot.lane.b32.xlu0 %v1006, 112
        %v1010 = vpop.permute.xlu0 %1009
        %v1013 = vunpack.c.l.b16 %v912
        %v1014 = vunpack.c.l.b16 %v913
        %v1015 = vpack.c.b16 %v1014, %v1013
        %v1018 = vsel %vm266, %v1008, 0
        %v1021 = vsel %vm266, %v1010, 0
        %1023 = vmatprep.subr.bf16.mxu0 0
        %1024 = vmatpush1.bf16.msra.mxu0 %v1015
        %1025 = vmatprep.subr.bf16.mxu0 0
        %1026 = vmatpush1.bf16.msra.mxu0 0
        %1027 = vmatprep.subr.bf16.mxu0 0
        %1028 = vmatpush1.bf16.msra.mxu0 0
        %1029 = vmatprep.subr.bf16.mxu0 0
        %1030 = vmatpush1.bf16.msra.mxu0 0
        %1031 = vmatprep.subr.bf16.mxu0 0
        %1032 = vmatpush1.bf16.msra.mxu0 0
        %1033 = vmatprep.subr.bf16.mxu0 0
        %1034 = vmatpush1.bf16.msra.mxu0 0
        %1035 = vmatprep.subr.bf16.mxu0 0
        %1036 = vmatpush1.bf16.msra.mxu0 0
        %1037 = vmatprep.subr.bf16.mxu0 0
        %1038 = vmatpush1.bf16.msra.mxu0 0
        %1039 = vmatprep.subr.bf16.mxu0 0
        %1040 = vmatpush1.bf16.msra.mxu0 0
        %1041 = vmatprep.subr.bf16.mxu0 0
        %1042 = vmatpush1.bf16.msra.mxu0 0
        %1043 = vmatprep.subr.bf16.mxu0 0
        %1044 = vmatpush1.bf16.msra.mxu0 0
        %1045 = vmatprep.subr.bf16.mxu0 0
        %1046 = vmatpush1.bf16.msra.mxu0 0
        %1047 = vmatprep.subr.bf16.mxu0 0
        %1048 = vmatpush1.bf16.msra.mxu0 0
        %1049 = vmatprep.subr.bf16.mxu0 0
        %1050 = vmatpush1.bf16.msra.mxu0 0
        %1051 = vmatprep.subr.bf16.mxu0 0
        %1052 = vmatpush1.bf16.msra.mxu0 0
        %1053 = vmatprep.subr.bf16.mxu0 0
        %1054 = vmatpush1.bf16.msra.mxu0 0
        %1055 = vmatprep.mubr.bf16.mxu0 0
        %1056 = vmatmul.mubr.bf16.gmra.mrb[0].mxu0 %v1018
        %v1057 = vpop.f32.mrb[0].mxu0
        %v1058 = vadd.f32 %v993, %v1057
        %v1059 = vpop.f32.mrb[0].mxu0
        %v1060 = vpop.f32.mrb[0].mxu0
        %v1061 = vadd.f32 %v996, %v1060
        %v1062 = vpop.f32.mrb[0].mxu0
        %1063 = vmatprep.mubr.bf16.mxu0 0
        %1064 = vmatmul.mubr.bf16.gmra.mrb[0].mxu0 %v1021
        %v1065 = vpop.f32.mrb[0].mxu0
        %v1066 = vadd.f32 %v1001, %v1065
        %v1067 = vpop.f32.mrb[0].mxu0
        %v1068 = vpop.f32.mrb[0].mxu0
        %v1069 = vpop.f32.mrb[0].mxu0
        %1070 = vdwg.mxu0
        %s1071 = scalar_lea.vmem [#allocation5], 40
        %v1072 = vld [vmem:[%s1071] sm:$0xf]
        %v1073 = vld [vmem:[%s1071 + $0x4] sm:$0xf]
        %v1074 = vrot.slane %v925, 1
        %v1075 = vrot.slane %v926, 1
        %v1076 = vsel %vm384, %v1074, %v1075
        %1077 = vrot.lane.b32.xlu0 %v1076, 112
        %v1078 = vpop.permute.xlu0 %1077
        %1079 = vrot.lane.b32.xlu0 %v1075, 112
        %v1080 = vpop.permute.xlu0 %1079
        %v1083 = vunpack.c.l.b16 %v1072
        %v1084 = vunpack.c.l.b16 %v1073
        %v1085 = vpack.c.b16 %v1084, %v1083
        %v1088 = vsel %vm266, %v1078, 0
        %v1091 = vsel %vm266, %v1080, 0
        %1093 = vmatprep.subr.bf16.mxu0 0
        %1094 = vmatpush1.bf16.msra.mxu0 %v1085
        %1095 = vmatprep.subr.bf16.mxu0 0
        %1096 = vmatpush1.bf16.msra.mxu0 0
        %1097 = vmatprep.subr.bf16.mxu0 0
        %1098 = vmatpush1.bf16.msra.mxu0 0
        %1099 = vmatprep.subr.bf16.mxu0 0
        %1100 = vmatpush1.bf16.msra.mxu0 0
        %1101 = vmatprep.subr.bf16.mxu0 0
        %1102 = vmatpush1.bf16.msra.mxu0 0
        %1103 = vmatprep.subr.bf16.mxu0 0
        %1104 = vmatpush1.bf16.msra.mxu0 0
        %1105 = vmatprep.subr.bf16.mxu0 0
        %1106 = vmatpush1.bf16.msra.mxu0 0
        %1107 = vmatprep.subr.bf16.mxu0 0
        %1108 = vmatpush1.bf16.msra.mxu0 0
        %1109 = vmatprep.subr.bf16.mxu0 0
        %1110 = vmatpush1.bf16.msra.mxu0 0
        %1111 = vmatprep.subr.bf16.mxu0 0
        %1112 = vmatpush1.bf16.msra.mxu0 0
        %1113 = vmatprep.subr.bf16.mxu0 0
        %1114 = vmatpush1.bf16.msra.mxu0 0
        %1115 = vmatprep.subr.bf16.mxu0 0
        %1116 = vmatpush1.bf16.msra.mxu0 0
        %1117 = vmatprep.subr.bf16.mxu0 0
        %1118 = vmatpush1.bf16.msra.mxu0 0
        %1119 = vmatprep.subr.bf16.mxu0 0
        %1120 = vmatpush1.bf16.msra.mxu0 0
        %1121 = vmatprep.subr.bf16.mxu0 0
        %1122 = vmatpush1.bf16.msra.mxu0 0
        %1123 = vmatprep.subr.bf16.mxu0 0
        %1124 = vmatpush1.bf16.msra.mxu0 0
        %1125 = vmatprep.mubr.bf16.mxu0 0
        %1126 = vmatmul.mubr.bf16.gmra.mrb[0].mxu0 %v1088
        %v1127 = vpop.f32.mrb[0].mxu0
        %v1128 = vadd.f32 0.0, %v1127
        %v1129 = vpop.f32.mrb[0].mxu0
        %v1130 = vpop.f32.mrb[0].mxu0
        %v1131 = vadd.f32 0.0, %v1130
        %v1132 = vpop.f32.mrb[0].mxu0
        %1133 = vmatprep.mubr.bf16.mxu0 0
        %1134 = vmatmul.mubr.bf16.gmra.mrb[0].mxu0 %v1091
        %v1135 = vpop.f32.mrb[0].mxu0
        %v1136 = vadd.f32 0.0, %v1135
        %v1137 = vpop.f32.mrb[0].mxu0
        %v1138 = vpop.f32.mrb[0].mxu0
        %v1139 = vpop.f32.mrb[0].mxu0
        %1140 = vdwg.mxu0
        %v1141 = vadd.f32 %v1058, %v1128
        %v1142 = vadd.f32 %v1061, %v1131
        %v1143 = vadd.f32 %v1066, %v1136
        %s1144 = scalar_lea.vmem [#allocation5], 56
        %v1145 = vld [vmem:[%s1144] sm:$0xf]
        %v1146 = vld [vmem:[%s1144 + $0x4] sm:$0xf]
        %v1147 = vrot.slane %v928, 1
        %v1148 = vrot.slane %v930, 2
        %v1149 = vor.u32 %v1147, %v1148
        %v1150 = vrot.slane %v939, 1
        %v1151 = vrot.slane %v935, 2
        %v1152 = vor.u32 %v1150, %v1151
        %v1153 = vsel %vm454, %v1149, %v1152
        %1154 = vrot.lane.b32.xlu0 %v1153, 112
        %v1155 = vpop.permute.xlu0 %1154
        %1156 = vrot.lane.b32.xlu0 %v1152, 112
        %v1157 = vpop.permute.xlu0 %1156
        %v1160 = vunpack.c.l.b16 %v1145
        %v1161 = vunpack.c.l.b16 %v1146
        %v1162 = vpack.c.b16 %v1161, %v1160
        %v1165 = vsel %vm266, %v1155, 0
        %v1168 = vsel %vm266, %v1157, 0
        %1170 = vmatprep.subr.bf16.mxu0 0
        %1171 = vmatpush1.bf16.msra.mxu0 %v1162
        %1172 = vmatprep.subr.bf16.mxu0 0
        %1173 = vmatpush1.bf16.msra.mxu0 0
        %1174 = vmatprep.subr.bf16.mxu0 0
        %1175 = vmatpush1.bf16.msra.mxu0 0
        %1176 = vmatprep.subr.bf16.mxu0 0
        %1177 = vmatpush1.bf16.msra.mxu0 0
        %1178 = vmatprep.subr.bf16.mxu0 0
        %1179 = vmatpush1.bf16.msra.mxu0 0
        %1180 = vmatprep.subr.bf16.mxu0 0
        %1181 = vmatpush1.bf16.msra.mxu0 0
        %1182 = vmatprep.subr.bf16.mxu0 0
        %1183 = vmatpush1.bf16.msra.mxu0 0
        %1184 = vmatprep.subr.bf16.mxu0 0
        %1185 = vmatpush1.bf16.msra.mxu0 0
        %1186 = vmatprep.subr.bf16.mxu0 0
        %1187 = vmatpush1.bf16.msra.mxu0 0
        %1188 = vmatprep.subr.bf16.mxu0 0
        %1189 = vmatpush1.bf16.msra.mxu0 0
        %1190 = vmatprep.subr.bf16.mxu0 0
        %1191 = vmatpush1.bf16.msra.mxu0 0
        %1192 = vmatprep.subr.bf16.mxu0 0
        %1193 = vmatpush1.bf16.msra.mxu0 0
        %1194 = vmatprep.subr.bf16.mxu0 0
        %1195 = vmatpush1.bf16.msra.mxu0 0
        %1196 = vmatprep.subr.bf16.mxu0 0
        %1197 = vmatpush1.bf16.msra.mxu0 0
        %1198 = vmatprep.subr.bf16.mxu0 0
        %1199 = vmatpush1.bf16.msra.mxu0 0
        %1200 = vmatprep.subr.bf16.mxu0 0
        %1201 = vmatpush1.bf16.msra.mxu0 0
        %1202 = vmatprep.mubr.bf16.mxu0 0
        %1203 = vmatmul.mubr.bf16.gmra.mrb[0].mxu0 %v1165
        %v1204 = vpop.f32.mrb[0].mxu0
        %v1205 = vadd.f32 0.0, %v1204
        %v1206 = vpop.f32.mrb[0].mxu0
        %v1207 = vpop.f32.mrb[0].mxu0
        %v1208 = vadd.f32 0.0, %v1207
        %v1209 = vpop.f32.mrb[0].mxu0
        %1210 = vmatprep.mubr.bf16.mxu0 0
        %1211 = vmatmul.mubr.bf16.gmra.mrb[0].mxu0 %v1168
        %v1212 = vpop.f32.mrb[0].mxu0
        %v1213 = vadd.f32 0.0, %v1212
        %v1214 = vpop.f32.mrb[0].mxu0
        %v1215 = vpop.f32.mrb[0].mxu0
        %v1216 = vpop.f32.mrb[0].mxu0
        %1217 = vdwg.mxu0
        %v1218 = vadd.f32 %v1141, %v1205
        %v1219 = vadd.f32 %v1142, %v1208
        %v1220 = vadd.f32 %v1143, %v1213
        %s1221 = scalar_lea.vmem [#allocation5], 72
        %v1222 = vld [vmem:[%s1221] sm:$0xf]
        %v1223 = vld [vmem:[%s1221 + $0x4] sm:$0xf]
        %v1224 = vrot.slane %v925, 2
        %v1225 = vrot.slane %v926, 2
        %v1226 = vsel %vm528, %v1224, %v1225
        %1227 = vrot.lane.b32.xlu0 %v1226, 112
        %v1228 = vpop.permute.xlu0 %1227
        %1229 = vrot.lane.b32.xlu0 %v1225, 112
        %v1230 = vpop.permute.xlu0 %1229
        %v1233 = vunpack.c.l.b16 %v1222
        %v1234 = vunpack.c.l.b16 %v1223
        %v1235 = vpack.c.b16 %v1234, %v1233
        %v1238 = vsel %vm266, %v1228, 0
        %v1241 = vsel %vm266, %v1230, 0
        %1243 = vmatprep.subr.bf16.mxu0 0
        %1244 = vmatpush1.bf16.msra.mxu0 %v1235
        %1245 = vmatprep.subr.bf16.mxu0 0
        %1246 = vmatpush1.bf16.msra.mxu0 0
        %1247 = vmatprep.subr.bf16.mxu0 0
        %1248 = vmatpush1.bf16.msra.mxu0 0
        %1249 = vmatprep.subr.bf16.mxu0 0
        %1250 = vmatpush1.bf16.msra.mxu0 0
        %1251 = vmatprep.subr.bf16.mxu0 0
        %1252 = vmatpush1.bf16.msra.mxu0 0
        %1253 = vmatprep.subr.bf16.mxu0 0
        %1254 = vmatpush1.bf16.msra.mxu0 0
        %1255 = vmatprep.subr.bf16.mxu0 0
        %1256 = vmatpush1.bf16.msra.mxu0 0
        %1257 = vmatprep.subr.bf16.mxu0 0
        %1258 = vmatpush1.bf16.msra.mxu0 0
        %1259 = vmatprep.subr.bf16.mxu0 0
        %1260 = vmatpush1.bf16.msra.mxu0 0
        %1261 = vmatprep.subr.bf16.mxu0 0
        %1262 = vmatpush1.bf16.msra.mxu0 0
        %1263 = vmatprep.subr.bf16.mxu0 0
        %1264 = vmatpush1.bf16.msra.mxu0 0
        %1265 = vmatprep.subr.bf16.mxu0 0
        %1266 = vmatpush1.bf16.msra.mxu0 0
        %1267 = vmatprep.subr.bf16.mxu0 0
        %1268 = vmatpush1.bf16.msra.mxu0 0
        %1269 = vmatprep.subr.bf16.mxu0 0
        %1270 = vmatpush1.bf16.msra.mxu0 0
        %1271 = vmatprep.subr.bf16.mxu0 0
        %1272 = vmatpush1.bf16.msra.mxu0 0
        %1273 = vmatprep.subr.bf16.mxu0 0
        %1274 = vmatpush1.bf16.msra.mxu0 0
        %1275 = vmatprep.mubr.bf16.mxu0 0
        %1276 = vmatmul.mubr.bf16.gmra.mrb[0].mxu0 %v1238
        %v1277 = vpop.f32.mrb[0].mxu0
        %v1278 = vadd.f32 0.0, %v1277
        %v1279 = vpop.f32.mrb[0].mxu0
        %v1280 = vpop.f32.mrb[0].mxu0
        %v1281 = vadd.f32 0.0, %v1280
        %v1282 = vpop.f32.mrb[0].mxu0
        %1283 = vmatprep.mubr.bf16.mxu0 0
        %1284 = vmatmul.mubr.bf16.gmra.mrb[0].mxu0 %v1241
        %v1285 = vpop.f32.mrb[0].mxu0
        %v1286 = vadd.f32 0.0, %v1285
        %v1287 = vpop.f32.mrb[0].mxu0
        %v1288 = vpop.f32.mrb[0].mxu0
        %v1289 = vpop.f32.mrb[0].mxu0
        %1290 = vdwg.mxu0
        %v1291 = vadd.f32 %v1218, %v1278
        %v1292 = vadd.f32 %v1219, %v1281
        %v1293 = vadd.f32 %v1220, %v1286
        %s1294 = scalar_lea.vmem [#allocation5], 88
        %v1295 = vld [vmem:[%s1294] sm:$0xf]
        %v1296 = vld [vmem:[%s1294 + $0x4] sm:$0xf]
        %v1297 = vrot.slane %v928, 2
        %v1298 = vrot.slane %v930, 3
        %v1299 = vor.u32 %v1297, %v1298
        %v1300 = vrot.slane %v939, 2
        %v1301 = vrot.slane %v935, 3
        %v1302 = vor.u32 %v1300, %v1301
        %v1303 = vsel %vm598, %v1299, %v1302
        %1304 = vrot.lane.b32.xlu0 %v1303, 112
        %v1305 = vpop.permute.xlu0 %1304
        %1306 = vrot.lane.b32.xlu0 %v1302, 112
        %v1307 = vpop.permute.xlu0 %1306
        %v1310 = vunpack.c.l.b16 %v1295
        %v1311 = vunpack.c.l.b16 %v1296
        %v1312 = vpack.c.b16 %v1311, %v1310
        %v1315 = vsel %vm266, %v1305, 0
        %v1318 = vsel %vm266, %v1307, 0
        %1320 = vmatprep.subr.bf16.mxu0 0
        %1321 = vmatpush1.bf16.msra.mxu0 %v1312
        %1322 = vmatprep.subr.bf16.mxu0 0
        %1323 = vmatpush1.bf16.msra.mxu0 0
        %1324 = vmatprep.subr.bf16.mxu0 0
        %1325 = vmatpush1.bf16.msra.mxu0 0
        %1326 = vmatprep.subr.bf16.mxu0 0
        %1327 = vmatpush1.bf16.msra.mxu0 0
        %1328 = vmatprep.subr.bf16.mxu0 0
        %1329 = vmatpush1.bf16.msra.mxu0 0
        %1330 = vmatprep.subr.bf16.mxu0 0
        %1331 = vmatpush1.bf16.msra.mxu0 0
        %1332 = vmatprep.subr.bf16.mxu0 0
        %1333 = vmatpush1.bf16.msra.mxu0 0
        %1334 = vmatprep.subr.bf16.mxu0 0
        %1335 = vmatpush1.bf16.msra.mxu0 0
        %1336 = vmatprep.subr.bf16.mxu0 0
        %1337 = vmatpush1.bf16.msra.mxu0 0
        %1338 = vmatprep.subr.bf16.mxu0 0
        %1339 = vmatpush1.bf16.msra.mxu0 0
        %1340 = vmatprep.subr.bf16.mxu0 0
        %1341 = vmatpush1.bf16.msra.mxu0 0
        %1342 = vmatprep.subr.bf16.mxu0 0
        %1343 = vmatpush1.bf16.msra.mxu0 0
        %1344 = vmatprep.subr.bf16.mxu0 0
        %1345 = vmatpush1.bf16.msra.mxu0 0
        %1346 = vmatprep.subr.bf16.mxu0 0
        %1347 = vmatpush1.bf16.msra.mxu0 0
        %1348 = vmatprep.subr.bf16.mxu0 0
        %1349 = vmatpush1.bf16.msra.mxu0 0
        %1350 = vmatprep.subr.bf16.mxu0 0
        %1351 = vmatpush1.bf16.msra.mxu0 0
        %1352 = vmatprep.mubr.bf16.mxu0 0
        %1353 = vmatmul.mubr.bf16.gmra.mrb[0].mxu0 %v1315
        %v1354 = vpop.f32.mrb[0].mxu0
        %v1355 = vadd.f32 0.0, %v1354
        %v1356 = vpop.f32.mrb[0].mxu0
        %v1357 = vpop.f32.mrb[0].mxu0
        %v1358 = vadd.f32 0.0, %v1357
        %v1359 = vpop.f32.mrb[0].mxu0
        %1360 = vmatprep.mubr.bf16.mxu0 0
        %1361 = vmatmul.mubr.bf16.gmra.mrb[0].mxu0 %v1318
        %v1362 = vpop.f32.mrb[0].mxu0
        %v1363 = vadd.f32 0.0, %v1362
        %v1364 = vpop.f32.mrb[0].mxu0
        %v1365 = vpop.f32.mrb[0].mxu0
        %v1366 = vpop.f32.mrb[0].mxu0
        %1367 = vdwg.mxu0
        %v1368 = vadd.f32 %v1291, %v1355
        %v1369 = vadd.f32 %v1292, %v1358
        %v1370 = vadd.f32 %v1293, %v1363
        %s1371 = scalar_lea.vmem [#allocation5], 104
        %v1372 = vld [vmem:[%s1371] sm:$0xf]
        %v1373 = vld [vmem:[%s1371 + $0x4] sm:$0xf]
        %v1374 = vrot.slane %v925, 3
        %v1375 = vrot.slane %v926, 3
        %v1376 = vsel %vm672, %v1374, %v1375
        %1377 = vrot.lane.b32.xlu0 %v1376, 112
        %v1378 = vpop.permute.xlu0 %1377
        %1379 = vrot.lane.b32.xlu0 %v1375, 112
        %v1380 = vpop.permute.xlu0 %1379
        %v1383 = vunpack.c.l.b16 %v1372
        %v1384 = vunpack.c.l.b16 %v1373
        %v1385 = vpack.c.b16 %v1384, %v1383
        %v1388 = vsel %vm266, %v1378, 0
        %v1391 = vsel %vm266, %v1380, 0
        %1393 = vmatprep.subr.bf16.mxu0 0
        %1394 = vmatpush1.bf16.msra.mxu0 %v1385
        %1395 = vmatprep.subr.bf16.mxu0 0
        %1396 = vmatpush1.bf16.msra.mxu0 0
        %1397 = vmatprep.subr.bf16.mxu0 0
        %1398 = vmatpush1.bf16.msra.mxu0 0
        %1399 = vmatprep.subr.bf16.mxu0 0
        %1400 = vmatpush1.bf16.msra.mxu0 0
        %1401 = vmatprep.subr.bf16.mxu0 0
        %1402 = vmatpush1.bf16.msra.mxu0 0
        %1403 = vmatprep.subr.bf16.mxu0 0
        %1404 = vmatpush1.bf16.msra.mxu0 0
        %1405 = vmatprep.subr.bf16.mxu0 0
        %1406 = vmatpush1.bf16.msra.mxu0 0
        %1407 = vmatprep.subr.bf16.mxu0 0
        %1408 = vmatpush1.bf16.msra.mxu0 0
        %1409 = vmatprep.subr.bf16.mxu0 0
        %1410 = vmatpush1.bf16.msra.mxu0 0
        %1411 = vmatprep.subr.bf16.mxu0 0
        %1412 = vmatpush1.bf16.msra.mxu0 0
        %1413 = vmatprep.subr.bf16.mxu0 0
        %1414 = vmatpush1.bf16.msra.mxu0 0
        %1415 = vmatprep.subr.bf16.mxu0 0
        %1416 = vmatpush1.bf16.msra.mxu0 0
        %1417 = vmatprep.subr.bf16.mxu0 0
        %1418 = vmatpush1.bf16.msra.mxu0 0
        %1419 = vmatprep.subr.bf16.mxu0 0
        %1420 = vmatpush1.bf16.msra.mxu0 0
        %1421 = vmatprep.subr.bf16.mxu0 0
        %1422 = vmatpush1.bf16.msra.mxu0 0
        %1423 = vmatprep.subr.bf16.mxu0 0
        %1424 = vmatpush1.bf16.msra.mxu0 0
        %1425 = vmatprep.mubr.bf16.mxu0 0
        %1426 = vmatmul.mubr.bf16.gmra.mrb[0].mxu0 %v1388
        %v1427 = vpop.f32.mrb[0].mxu0
        %v1428 = vadd.f32 0.0, %v1427
        %v1429 = vpop.f32.mrb[0].mxu0
        %v1430 = vpop.f32.mrb[0].mxu0
        %v1431 = vadd.f32 0.0, %v1430
        %v1432 = vpop.f32.mrb[0].mxu0
        %1433 = vmatprep.mubr.bf16.mxu0 0
        %1434 = vmatmul.mubr.bf16.gmra.mrb[0].mxu0 %v1391
        %v1435 = vpop.f32.mrb[0].mxu0
        %v1436 = vadd.f32 0.0, %v1435
        %v1437 = vpop.f32.mrb[0].mxu0
        %v1438 = vpop.f32.mrb[0].mxu0
        %v1439 = vpop.f32.mrb[0].mxu0
        %1440 = vdwg.mxu0
        %v1441 = vadd.f32 %v1368, %v1428
        %v1442 = vadd.f32 %v1369, %v1431
        %v1443 = vadd.f32 %v1370, %v1436
        %s1444 = scalar_lea.vmem [#allocation5], 120
        %v1445 = vld [vmem:[%s1444] sm:$0xf]
        %v1446 = vld [vmem:[%s1444 + $0x4] sm:$0xf]
        %v1447 = vrot.slane %v928, 3
        %v1448 = vrot.slane %v930, 4
        %v1449 = vor.u32 %v1447, %v1448
        %v1450 = vrot.slane %v939, 3
        %v1451 = vrot.slane %v935, 4
        %v1452 = vor.u32 %v1450, %v1451
        %v1453 = vsel %vm742, %v1449, %v1452
        %1454 = vrot.lane.b32.xlu0 %v1453, 112
        %v1455 = vpop.permute.xlu0 %1454
        %1456 = vrot.lane.b32.xlu0 %v1452, 112
        %v1457 = vpop.permute.xlu0 %1456
        %v1460 = vunpack.c.l.b16 %v1445
        %v1461 = vunpack.c.l.b16 %v1446
        %v1462 = vpack.c.b16 %v1461, %v1460
        %v1465 = vsel %vm266, %v1455, 0
        %v1468 = vsel %vm266, %v1457, 0
        %1470 = vmatprep.subr.bf16.mxu0 0
        %1471 = vmatpush1.bf16.msra.mxu0 %v1462
        %1472 = vmatprep.subr.bf16.mxu0 0
        %1473 = vmatpush1.bf16.msra.mxu0 0
        %1474 = vmatprep.subr.bf16.mxu0 0
        %1475 = vmatpush1.bf16.msra.mxu0 0
        %1476 = vmatprep.subr.bf16.mxu0 0
        %1477 = vmatpush1.bf16.msra.mxu0 0
        %1478 = vmatprep.subr.bf16.mxu0 0
        %1479 = vmatpush1.bf16.msra.mxu0 0
        %1480 = vmatprep.subr.bf16.mxu0 0
        %1481 = vmatpush1.bf16.msra.mxu0 0
        %1482 = vmatprep.subr.bf16.mxu0 0
        %1483 = vmatpush1.bf16.msra.mxu0 0
        %1484 = vmatprep.subr.bf16.mxu0 0
        %1485 = vmatpush1.bf16.msra.mxu0 0
        %1486 = vmatprep.subr.bf16.mxu0 0
        %1487 = vmatpush1.bf16.msra.mxu0 0
        %1488 = vmatprep.subr.bf16.mxu0 0
        %1489 = vmatpush1.bf16.msra.mxu0 0
        %1490 = vmatprep.subr.bf16.mxu0 0
        %1491 = vmatpush1.bf16.msra.mxu0 0
        %1492 = vmatprep.subr.bf16.mxu0 0
        %1493 = vmatpush1.bf16.msra.mxu0 0
        %1494 = vmatprep.subr.bf16.mxu0 0
        %1495 = vmatpush1.bf16.msra.mxu0 0
        %1496 = vmatprep.subr.bf16.mxu0 0
        %1497 = vmatpush1.bf16.msra.mxu0 0
        %1498 = vmatprep.subr.bf16.mxu0 0
        %1499 = vmatpush1.bf16.msra.mxu0 0
        %1500 = vmatprep.subr.bf16.mxu0 0
        %1501 = vmatpush1.bf16.msra.mxu0 0
        %1502 = vmatprep.mubr.bf16.mxu0 0
        %1503 = vmatmul.mubr.bf16.gmra.mrb[0].mxu0 %v1465
        %v1504 = vpop.f32.mrb[0].mxu0
        %v1505 = vadd.f32 0.0, %v1504
        %v1506 = vpop.f32.mrb[0].mxu0
        %v1507 = vpop.f32.mrb[0].mxu0
        %v1508 = vadd.f32 0.0, %v1507
        %v1509 = vpop.f32.mrb[0].mxu0
        %1510 = vmatprep.mubr.bf16.mxu0 0
        %1511 = vmatmul.mubr.bf16.gmra.mrb[0].mxu0 %v1468
        %v1512 = vpop.f32.mrb[0].mxu0
        %v1513 = vadd.f32 0.0, %v1512
        %v1514 = vpop.f32.mrb[0].mxu0
        %v1515 = vpop.f32.mrb[0].mxu0
        %v1516 = vpop.f32.mrb[0].mxu0
        %1517 = vdwg.mxu0
        %v1518 = vadd.f32 %v1441, %v1505
        %v1519 = vadd.f32 %v1442, %v1508
        %v1520 = vadd.f32 %v1443, %v1513
        %s1521 = scalar_lea.vmem %s2, 1
        %v1522 = vld [vmem:[%s1521] sm:$0x1]
        %v1524 = vlaneseq
        %v1525 = vshrl.u32 %v1524, 7
        %v1526 = vsub.s32 0, %v1525
        %v1527 = vrot.slane %v1522, %v1526
        %v1529 = vadd.f32 %v1518, %v1527
        %v1530 = vadd.f32 %v1519, %v1527
        %v1531 = vadd.f32 %v1520, %v1527
        %v1532 = vmul.f32 %v1529, 0.5
        %v1533 = vmul.f32 %v1530, 0.5
        %v1534 = vmul.f32 %v1531, 0.5
        %v1535 = vmul.f32 %v1529, 0.70710677
        %v1536 = vmul.f32 %v1530, 0.70710677
        %v1537 = vmul.f32 %v1531, 0.70710677
        %vm1538 = vcmp.lt.f32.partialorder %v1535, 0.0
        %vm1539 = vcmp.lt.f32.partialorder %v1536, 0.0
        %vm1540 = vcmp.lt.f32.partialorder %v1537, 0.0
        %v1541 = vsel %vm1538, -1.0, 1.0
        %v1542 = vsel %vm1539, -1.0, 1.0
        %v1543 = vsel %vm1540, -1.0, 1.0
        %v1544 = vand.u32 2147483647, %v1535
        %v1545 = vand.u32 2147483647, %v1536
        %v1546 = vand.u32 2147483647, %v1537
        %v1547 = vmul.f32 %v1544, 0.3275911
        %v1548 = vmul.f32 %v1545, 0.3275911
        %v1549 = vmul.f32 %v1546, 0.3275911
        %v1550 = vadd.f32 %v1547, 1.0
        %v1551 = vadd.f32 %v1548, 1.0
        %v1552 = vadd.f32 %v1549, 1.0
        %v1553 = vrcp.pop %v1550
        %v1554 = vmul.f32 1.0, %v1553
        %v1555 = vrcp.pop %v1551
        %v1556 = vmul.f32 1.0, %v1555
        %v1557 = vrcp.pop %v1552
        %v1558 = vmul.f32 1.0, %v1557
        %v1559 = vmul.f32 %v1554, 1.0614054
        %v1560 = vmul.f32 %v1556, 1.0614054
        %v1561 = vmul.f32 %v1558, 1.0614054
        %v1562 = vadd.f32 %v1559, -1.4531521
        %v1563 = vadd.f32 %v1560, -1.4531521
        %v1564 = vadd.f32 %v1561, -1.4531521
        %v1565 = vmul.f32 %v1562, %v1554
        %v1566 = vmul.f32 %v1563, %v1556
        %v1567 = vmul.f32 %v1564, %v1558
        %v1568 = vadd.f32 %v1565, 1.4214138
        %v1569 = vadd.f32 %v1566, 1.4214138
        %v1570 = vadd.f32 %v1567, 1.4214138
        %v1571 = vmul.f32 %v1568, %v1554
        %v1572 = vmul.f32 %v1569, %v1556
        %v1573 = vmul.f32 %v1570, %v1558
        %v1574 = vadd.f32 %v1571, -0.28449672
        %v1575 = vadd.f32 %v1572, -0.28449672
        %v1576 = vadd.f32 %v1573, -0.28449672
        %v1577 = vmul.f32 %v1574, %v1554
        %v1578 = vmul.f32 %v1575, %v1556
        %v1579 = vmul.f32 %v1576, %v1558
        %v1580 = vadd.f32 %v1577, 0.2548296
        %v1581 = vadd.f32 %v1578, 0.2548296
        %v1582 = vadd.f32 %v1579, 0.2548296
        %v1583 = vmul.f32 %v1580, %v1554
        %v1584 = vmul.f32 %v1581, %v1556
        %v1585 = vmul.f32 %v1582, %v1558
        %v1586 = vsub.f32 0.0, %v1544
        %v1587 = vsub.f32 0.0, %v1545
        %v1588 = vsub.f32 0.0, %v1546
        %v1589 = vmul.f32 %v1586, %v1544
        %v1590 = vmul.f32 %v1587, %v1545
        %v1591 = vmul.f32 %v1588, %v1546
        %v1592 = vmul.f32 %v1589, 1.442695
        %v1593 = vpow.pop %v1592
        %v1594 = vmul.f32 %v1590, 1.442695
        %v1595 = vpow.pop %v1594
        %v1596 = vmul.f32 %v1591, 1.442695
        %v1597 = vpow.pop %v1596
        %v1598 = vmul.f32 %v1583, %v1593
        %v1599 = vmul.f32 %v1584, %v1595
        %v1600 = vmul.f32 %v1585, %v1597
        %v1601 = vsub.f32 1.0, %v1598
        %v1602 = vsub.f32 1.0, %v1599
        %v1603 = vsub.f32 1.0, %v1600
        %v1604 = vmul.f32 %v1541, %v1601
        %v1605 = vmul.f32 %v1542, %v1602
        %v1606 = vmul.f32 %v1543, %v1603
        %v1607 = vadd.f32 %v1604, 1.0
        %v1608 = vadd.f32 %v1605, 1.0
        %v1609 = vadd.f32 %v1606, 1.0
        %v1610 = vmul.f32 %v1532, %v1607
        %v1611 = vmul.f32 %v1533, %v1608
        %v1612 = vmul.f32 %v1534, %v1609
        %1616 = vrot.lane.b32.xlu0 %v1610, 16
        %v1617 = vpop.permute.xlu0 %1616
        %1618 = vrot.lane.b32.xlu0 %v1611, 16
        %v1619 = vpop.permute.xlu0 %1618
        %1620 = vrot.lane.b32.xlu0 %v1612, 16
        %v1621 = vpop.permute.xlu0 %1620
        %vm1625 = vcmask 261248
        %1626 = vst.msk [vmem:[%s217] sm:$0xff] %vm1625, %v1617
        %1627 = vst.msk [vmem:[%s217 + $0x8] sm:$0xff] %vm1625, %v1619
        %1628 = vst.msk [vmem:[%s217 + $0x10] sm:$0xff] %vm1625, %v1621
        %s1629 = sand.u32 %s111, 1
        %s1630 = scalar_lea.sflag [#allocation4], %s1629
        %s1631 = sand.u32 %s111, 1
        %s1632 = smul.addr %s1631, 24
        %s1633 = scalar_lea.vmem [#allocation7], %s1632
        // Predicated region
        $region41: #{tpu_custom_call.1} parent=31 // pred_check
          %p1634 = pneg %p121
        $region42: #{tpu_custom_call.1} parent=31 // pred_check_branch
          %1636 = sbr.rel (%p1634) target = $region44
        $region43: #{tpu_custom_call.1} parent=31 // pred_region
          %s1637 = smul.u32 3, %s26
          %s1639 = ssub.s32 384, 384
          %1640 = vsyncadd %s1630, %s1639
          %s1641 = smul.addr %s25, 3
          %s1642 = sadd.s32 %s1637, %s1641
          %s1643 = smul.addr %s1642, 128
          %s1644 = scalar_lea.hbm %s3, %s1643
          %s1645 = sshll.u32 %s1633, 4
          %s1646 = int_to_ptr.vmem [resolvable:$true] %s1645
          %1651 = dma.vmem_to_hbm [thread:$0]  %s1646, 384, %s1644, %s1630, 128, 128, 8
        $region44: #{tpu_custom_call.1} parent=31 // pred_fallthru
          _
      $region32: #{tpu_custom_call.1} parent=5 // pred_fallthru
        _
      %p1652 = scmp.le.s32.totalorder 2, %s16
      // Predicated region
      $region45: #{tpu_custom_call.1} parent=5 // pred_check
        %p1653 = pneg %p1652
      $region46: #{tpu_custom_call.1} parent=5 // pred_check_branch
        %1655 = sbr.rel (%p1653) target = $region48
      $region47: #{tpu_custom_call.1} parent=5 // pred_region
        %s1656 = ssub.s32 %s16, 2
        // Predicated region
        $region49: #{tpu_custom_call.1} parent=47 // pred_check
          %p1657 = pneg %p127
        $region50: #{tpu_custom_call.1} parent=47 // pred_check_branch
          %1659 = sbr.rel (%p1657) target = $region52
        $region51: #{tpu_custom_call.1} parent=47 // pred_region
          %s1660 = sand.u32 %s112, 1
          %s1661 = scalar_lea.sflag [#allocation4], %s1660
          %s1662 = sand.u32 %s112, 1
          %s1663 = smul.addr %s1662, 24
          %s1664 = scalar_lea.vmem [#allocation7], %s1663
          %1665 = dma.done %s1661, 384
        $region52: #{tpu_custom_call.1} parent=47 // pred_fallthru
          _
      $region48: #{tpu_custom_call.1} parent=5 // pred_fallthru
        _
    $region6: #{tpu_custom_call.1} parent=1 // loop_footer
      %s20 = sadd.s32 1, %s16
    $region7: #{tpu_custom_call.1} parent=1 // loop_footer_branch
      %15 = sbr.rel target = $region3
    $region8: #{tpu_custom_call.1} parent=1 // loop_exit
      _
    %1666 = vsyncpa [#allocation3], 1
    %s1667 = scalar_lea.sflag [#allocation3], 1
    %1668 = vsyncpa %s1667, 1
    %1669 = vsyncpa [#allocation6], 1
    %1670 = vsyncpa [#allocation4], 1
    %s1671 = scalar_lea.sflag [#allocation4], 1
    %1672 = vsyncpa %s1671, 1

</llo_original>
